<compile_context>
chip_gen: v7x
topology: tpu7x:2x2x1
jax: 0.10.0
libtpu: 0.0.40
codegen_flags: <defaults>
</compile_context>

<pallas_src>
import functools
import math

import jax
import jax.numpy as jnp
from jax.experimental import pallas as pl
from jax.experimental.pallas import tpu as pltpu

# ---- small synthetic AST config (same structure as the 768-dim pretrained model) ----
BATCH = 2
TIME = 16          # max_length            (1024 in the real model)
MEL = 16           # num_mel_bins          (128)
PATCH = 4          # patch_size            (16)
FSTRIDE = 4        # frequency_stride      (10)
TSTRIDE = 4        # time_stride           (10)
HIDDEN = 32        # hidden_size           (768)
NUM_HEADS = 4      # num_attention_heads   (12)
HEAD_DIM = HIDDEN // NUM_HEADS
NUM_LAYERS = 2     # num_hidden_layers     (12)
INTERMEDIATE = 64  # intermediate_size     (3072)
NUM_LABELS = 5
LN_EPS = 1e-12     # ASTConfig.layer_norm_eps

F_OUT = (MEL - PATCH) // FSTRIDE + 1
T_OUT = (TIME - PATCH) // TSTRIDE + 1
NUM_PATCHES = F_OUT * T_OUT
SEQ = NUM_PATCHES + 2                                # + cls token + distillation token

# Query tile for attention: 256 at real scale, whole (padded) sequence when tiny.
_Q_TARGET = 256
Q_TILE = _Q_TARGET if SEQ > _Q_TARGET else ((SEQ + 7) // 8) * 8
SEQ_PAD = ((SEQ + Q_TILE - 1) // Q_TILE) * Q_TILE    # padded keys masked in attention

ROW_BLOCK = 512                                      # row tile for the matmul grids
ATTN_SCALE = 1.0 / math.sqrt(HEAD_DIM)
# Sized so double-buffered 512-row tiles + bf16 weights fit v7x's 64 MiB physical VMEM;
# v5e/v6e have 128 MiB so this only raises the default 16/32 MiB scoped limit.
VMEM_LIMIT = 64 * 1024 * 1024


# ----------------------------- in-kernel helpers -----------------------------
def _ln(x, g, b):
    mu = jnp.mean(x, axis=-1, keepdims=True)
    var = jnp.mean(jnp.square(x - mu), axis=-1, keepdims=True)
    return (x - mu) * jax.lax.rsqrt(var + LN_EPS) * g + b


def _gelu_exact(x):
    # Exact (erf) GELU via the Abramowitz–Stegun 7.1.26 rational approximation
    # (|err| <= 1.5e-7); lowers on every Mosaic target without an erf primitive.
    # On v6e/v7x these VALU ops hide under the MXU; on v5e the tanh-approx GELU is a
    # cheaper alternative if the VALU slot becomes binding.
    z = x * (1.0 / math.sqrt(2.0))
    az = jnp.abs(z)
    t = 1.0 / (1.0 + 0.3275911 * az)
    poly = t * (0.254829592 + t * (-0.284496736 + t * (1.421413741
             + t * (-1.453152027 + t * 1.061405429))))
    erf_az = 1.0 - poly * jnp.exp(-az * az)
    erf_z = jnp.where(z >= 0.0, erf_az, -erf_az)
    return 0.5 * x * (1.0 + erf_z)


# ----------------------------- Pallas kernels --------------------------------
# NOTE: x_ref[...].astype(jnp.bfloat16) is a no-op when the activation already arrives
# in bf16 (QKV / GELU intermediate); it only materializes a cast for f32 inputs.
def _matmul_kernel(x_ref, w_ref, b_ref, o_ref):
    o_ref[...] = (jnp.dot(x_ref[...].astype(jnp.bfloat16), w_ref[...],
                          preferred_element_type=jnp.float32)
                  + b_ref[...]).astype(o_ref.dtype)


def _matmul_res_kernel(x_ref, w_ref, b_ref, r_ref, o_ref):
    o_ref[...] = (jnp.dot(x_ref[...].astype(jnp.bfloat16), w_ref[...],
                          preferred_element_type=jnp.float32)
                  + b_ref[...] + r_ref[...]).astype(o_ref.dtype)


def _ln_matmul_kernel(x_ref, g_ref, bln_ref, w_ref, b_ref, o_ref):
    xn = _ln(x_ref[...], g_ref[...], bln_ref[...])
    o_ref[...] = (jnp.dot(xn.astype(jnp.bfloat16), w_ref[...],
                          preferred_element_type=jnp.float32)
                  + b_ref[...]).astype(o_ref.dtype)


def _ln_matmul_gelu_kernel(x_ref, g_ref, bln_ref, w_ref, b_ref, o_ref):
    xn = _ln(x_ref[...], g_ref[...], bln_ref[...])
    h = jnp.dot(xn.astype(jnp.bfloat16), w_ref[...],
                preferred_element_type=jnp.float32) + b_ref[...]
    o_ref[...] = _gelu_exact(h).astype(o_ref.dtype)


def _attention_kernel(q_ref, k_ref, v_ref, wo_ref, bo_ref, res_ref, o_ref, *, scale, seq):
    # One (batch, query-tile, head) grid point.
    #   q_ref : (Q_TILE, d) bf16      k_ref/v_ref : (S_pad, d) bf16
    #   wo_ref: (d, H) bf16 (this head's rows of the output projection)
    #   res_ref/o_ref: (Q_TILE, H) f32 — o_ref stays resident across the head axis
    #   (same block index), so it doubles as the accumulator (P3 pattern).
    hh = pl.program_id(2)

    @pl.when(hh == 0)
    def _():
        o_ref[...] = res_ref[...] + bo_ref[...]          # residual + out-proj bias

    q = q_ref[...]
    k = k_ref[...]
    v = v_ref[...]
    s = jax.lax.dot_general(q, k, (((1,), (1,)), ((), ())),
                            preferred_element_type=jnp.float32) * scale   # (tq, S_pad)
    kmask = jax.lax.broadcasted_iota(jnp.int32, s.shape, 1) < seq          # mask pad keys
    s = jnp.where(kmask, s, -1e30)
    s = s - jnp.max(s, axis=-1, keepdims=True)
    p = jnp.exp(s)
    p = p * pl.reciprocal(jnp.sum(p, axis=-1, keepdims=True), approx=True)
    ctx = jnp.dot(p.astype(jnp.bfloat16), v, preferred_element_type=jnp.float32)  # (tq, d)
    # fold this head's slice of the output projection and accumulate (single lane-dense
    # writeback when the block retires; padded query rows are garbage but never read).
    o_ref[...] += jnp.dot(ctx.astype(jnp.bfloat16), wo_ref[...],
                          preferred_element_type=jnp.float32)


# --------------------------- pallas_call wrappers -----------------------------
def _pick_row_block(rows, target=ROW_BLOCK):
    # Whole-array block when it fits the target; otherwise a fixed `target` tile with a
    # cdiv grid (Pallas pads/masks the ragged last tile).  No silent fall-through to one
    # giant block when `rows` has no small divisor.
    return rows if rows <= target else target


def _row_call(kernel, args, row_tiled, out_cols, out_dtype=jnp.float32):
    """Row-tiled pallas_call: arg[i] is tiled over rows iff row_tiled[i]; others full."""
    rows = args[0].shape[0]
    blk = _pick_row_block(rows)
    in_specs = []
    for a, tiled in zip(args, row_tiled):
        if tiled:
            in_specs.append(pl.BlockSpec((blk, a.shape[1]), lambda i: (i, 0)))
        else:
            in_specs.append(pl.BlockSpec(a.shape, lambda i: (0, 0)))
    return pl.pallas_call(
        kernel,
        grid=(pl.cdiv(rows, blk),),
        in_specs=in_specs,
        out_specs=pl.BlockSpec((blk, out_cols), lambda i: (i, 0)),
        out_shape=jax.ShapeDtypeStruct((rows, out_cols), out_dtype),
        compiler_params=pltpu.CompilerParams(
            dimension_semantics=("parallel",),
            vmem_limit_bytes=VMEM_LIMIT),
    )(*args)


def pallas_matmul(x, w, b, out_dtype=jnp.float32):
    return _row_call(_matmul_kernel, (x, w, b), (True, False, False),
                     w.shape[1], out_dtype)


def pallas_matmul_res(x, w, b, r):
    return _row_call(_matmul_res_kernel, (x, w, b, r),
                     (True, False, False, True), w.shape[1], jnp.float32)


def pallas_ln_matmul(x, g, bln, w, b, out_dtype=jnp.bfloat16):
    return _row_call(_ln_matmul_kernel, (x, g, bln, w, b),
                     (True, False, False, False, False), w.shape[1], out_dtype)


def pallas_ln_matmul_gelu(x, g, bln, w, b, out_dtype=jnp.bfloat16):
    return _row_call(_ln_matmul_gelu_kernel, (x, g, bln, w, b),
                     (True, False, False, False, False), w.shape[1], out_dtype)


def pallas_attention(qkvh, wo, bo, res):
    """Attention + output projection + residual, fused.

    qkvh: (B, 3, NUM_HEADS, S_pad, HEAD_DIM) bf16 (head-major fused QKV)
    wo  : (NUM_HEADS, HEAD_DIM, HIDDEN) bf16      bo: (1, HIDDEN) f32
    res : (B, S_pad, HIDDEN) f32 residual stream
    returns (B, S_pad, HIDDEN) f32 = res + bo + attn(q,k,v) @ W_o
    """
    B = res.shape[0]
    n_q = SEQ_PAD // Q_TILE
    return pl.pallas_call(
        functools.partial(_attention_kernel, scale=ATTN_SCALE, seq=SEQ),
        grid=(B, n_q, NUM_HEADS),          # head axis innermost = reduction axis
        in_specs=[
            # q tile / full k / full v: all blocks end on the full minor dim (HEAD_DIM),
            # so they are layout-legal at both toy (d=8) and real (d=64) scale.
            pl.BlockSpec((None, None, None, Q_TILE, HEAD_DIM),
                         lambda b, qi, hh: (b, 0, hh, qi, 0)),
            pl.BlockSpec((None, None, None, SEQ_PAD, HEAD_DIM),
                         lambda b, qi, hh: (b, 1, hh, 0, 0)),
            pl.BlockSpec((None, None, None, SEQ_PAD, HEAD_DIM),
                         lambda b, qi, hh: (b, 2, hh, 0, 0)),
            pl.BlockSpec((None, HEAD_DIM, HIDDEN), lambda b, qi, hh: (hh, 0, 0)),
            pl.BlockSpec((1, HIDDEN), lambda b, qi, hh: (0, 0)),
            pl.BlockSpec((None, Q_TILE, HIDDEN), lambda b, qi, hh: (b, qi, 0)),
        ],
        out_specs=pl.BlockSpec((None, Q_TILE, HIDDEN), lambda b, qi, hh: (b, qi, 0)),
        out_shape=jax.ShapeDtypeStruct((B, SEQ_PAD, HIDDEN), jnp.float32),
        compiler_params=pltpu.CompilerParams(
            dimension_semantics=("parallel", "parallel", "arbitrary"),
            vmem_limit_bytes=VMEM_LIMIT),
    )(qkvh, qkvh, qkvh, wo, bo, res)


# ------------------------------- parameters -----------------------------------
def init_params(key):
    ks = iter(jax.random.split(key, 16 + 8 * NUM_LAYERS))

    def nrm(shape, dtype=jnp.bfloat16, scale=0.02):
        return (scale * jax.random.normal(next(ks), shape, jnp.float32)).astype(dtype)

    zeros = lambda shape: jnp.zeros(shape, jnp.float32)
    ones = lambda shape: jnp.ones(shape, jnp.float32)

    params = {
        # Conv2d(1, H, (p,p)) weight reshaped to (p*p, H); stored bf16 for the MXU.
        "patch_w": nrm((PATCH * PATCH, HIDDEN)),
        "patch_b": zeros((1, HIDDEN)),
        "cls_token": nrm((1, 1, HIDDEN), jnp.float32),
        "dist_token": nrm((1, 1, HIDDEN), jnp.float32),
        "pos_emb": nrm((1, SEQ, HIDDEN), jnp.float32),
        "final_ln_g": ones((1, HIDDEN)), "final_ln_b": zeros((1, HIDDEN)),
        "head_ln_g": ones((1, HIDDEN)), "head_ln_b": zeros((1, HIDDEN)),
        "head_w": nrm((HIDDEN, NUM_LABELS), jnp.float32),
        "head_b": zeros((NUM_LABELS,)),
        "layers": [],
    }
    for _ in range(NUM_LAYERS):
        params["layers"].append({
            "ln1_g": ones((1, HIDDEN)), "ln1_b": zeros((1, HIDDEN)),
            # fused [q|k|v] projection: weight (H, 3H), bias (1, 3H); columns within each
            # section are head-major (matches the in-wrapper (3, NH, d) reshape).
            "qkv_w": nrm((HIDDEN, 3 * HIDDEN)), "qkv_b": zeros((1, 3 * HIDDEN)),
            # attention output projection, stored head-major: ao_w.reshape(NH, d, H)
            "ao_w": nrm((NUM_HEADS, HEAD_DIM, HIDDEN)), "ao_b": zeros((1, HIDDEN)),
            "ln2_g": ones((1, HIDDEN)), "ln2_b": zeros((1, HIDDEN)),
            "i_w": nrm((HIDDEN, INTERMEDIATE)), "i_b": zeros((1, INTERMEDIATE)),
            "o_w": nrm((INTERMEDIATE, HIDDEN)), "o_b": zeros((1, HIDDEN)),
        })
    return params


# --------------------------------- forward ------------------------------------
def ast_forward(params, x):
    B = x.shape[0]

    # ASTPatchEmbeddings: (B,T,F) -> (B,1,F,T) -> Conv2d(1,H,(p,p),(fs,ts)) as matmul.
    # Patch extraction is XLA glue (lax.conv_general_dilated_patches handles the
    # overlapping patches at real AST strides).
    img = jnp.transpose(x, (0, 2, 1))[:, None]                            # (B,1,F,T)
    patches = jax.lax.conv_general_dilated_patches(
        img, filter_shape=(PATCH, PATCH), window_strides=(FSTRIDE, TSTRIDE),
        padding="VALID", dimension_numbers=("NCHW", "OIHW", "NCHW"))      # (B,p*p,Fo,To)
    patches = patches.reshape(B, PATCH * PATCH, NUM_PATCHES).transpose(0, 2, 1)
    patches = patches.reshape(B * NUM_PATCHES, PATCH * PATCH)
    # NOTE: when loading real PyTorch Conv2d weights (H,1,kh,kw), use w.reshape(H, kh*kw).T
    # so the (kh,kw) flatten order matches conv_general_dilated_patches' channel order.

    pe = pallas_matmul(patches, params["patch_w"], params["patch_b"])     # f32
    pe = pe.reshape(B, NUM_PATCHES, HIDDEN)

    # ASTEmbeddings: prepend cls + distillation tokens, add position embeddings,
    # pad the sequence to a Q_TILE multiple (padded keys masked inside attention).
    cls = jnp.broadcast_to(params["cls_token"], (B, 1, HIDDEN))
    dist = jnp.broadcast_to(params["dist_token"], (B, 1, HIDDEN))
    h = jnp.concatenate([cls, dist, pe], axis=1) + params["pos_emb"]      # (B,S,H)
    h = jnp.pad(h, ((0, 0), (0, SEQ_PAD - SEQ), (0, 0)))                  # (B,S_pad,H)
    h = h.reshape(B * SEQ_PAD, HIDDEN)

    for lp in params["layers"]:
        # fused LayerNorm_before + QKV projection (one matmul, lane-dense N=3H), bf16 out
        qkv = pallas_ln_matmul(h, lp["ln1_g"], lp["ln1_b"], lp["qkv_w"], lp["qkv_b"])
        # head-major QKV layout for the attention grid (bf16, one XLA transpose pass)
        qkvh = qkv.reshape(B, SEQ_PAD, 3, NUM_HEADS, HEAD_DIM).transpose(0, 2, 3, 1, 4)
        # attention + ASTSelfOutput (W_o, bias) + residual fused in one pallas_call
        h = pallas_attention(qkvh, lp["ao_w"], lp["ao_b"],
                             h.reshape(B, SEQ_PAD, HIDDEN))
        h = h.reshape(B * SEQ_PAD, HIDDEN)
        # fused LayerNorm_after + ASTIntermediate matmul + exact GELU, bf16 out
        y = pallas_ln_matmul_gelu(h, lp["ln2_g"], lp["ln2_b"], lp["i_w"], lp["i_b"])
        h = pallas_matmul_res(y, lp["o_w"], lp["o_b"], h)                 # ASTOutput + residual

    # Final encoder LayerNorm is per-token, and only cls/dist tokens feed the pooled
    # output -> apply it (and the tiny ASTMLPHead) to those two rows in plain XLA.
    h = h.reshape(B, SEQ_PAD, HIDDEN)
    tok = h[:, :2, :]                                                     # (B,2,H)
    mu = jnp.mean(tok, axis=-1, keepdims=True)
    var = jnp.mean(jnp.square(tok - mu), axis=-1, keepdims=True)
    tok = (tok - mu) * jax.lax.rsqrt(var + LN_EPS) * params["final_ln_g"] + params["final_ln_b"]
    pooled = (tok[:, 0] + tok[:, 1]) * 0.5                                # (B,H)
    mu = jnp.mean(pooled, axis=-1, keepdims=True)
    var = jnp.mean(jnp.square(pooled - mu), axis=-1, keepdims=True)
    pooled = (pooled - mu) * jax.lax.rsqrt(var + LN_EPS) * params["head_ln_g"] + params["head_ln_b"]
    return pooled @ params["head_w"] + params["head_b"]                   # (B, NUM_LABELS)


if __name__ == "__main__":
    x = jax.random.normal(jax.random.PRNGKey(0), (BATCH, TIME, MEL), dtype=jnp.float32)
    params = init_params(jax.random.PRNGKey(1))

    fwd = jax.jit(ast_forward)
    logits = fwd(params, x)
    jax.block_until_ready(logits)
    assert logits.shape == (BATCH, NUM_LABELS)
    assert bool(jnp.all(jnp.isfinite(logits)))
    print("KERNEL_OK")
</pallas_src>

<mosaic_0001>
module attributes {stable_mosaic.version = 11 : i64} {
  func.func @_matmul_kernel(%arg0: i32, %arg1: memref<32x16xf32, #tpu.memory_space<vmem>>, %arg2: memref<16x32xbf16, #tpu.memory_space<vmem>>, %arg3: memref<1x32xf32, #tpu.memory_space<vmem>>, %arg4: memref<32x32xf32, #tpu.memory_space<vmem>>) attributes {dimension_semantics = [#tpu.dimension_semantics<parallel>], iteration_bounds = array<i64: 1>, scalar_prefetch = 0 : i64, scratch_operands = 0 : i64, tpu.core_type = #tpu.core_type<tc>, window_params = [{transform_indices = @transform_0, window_bounds = array<i64: 32, 16>}, {pipeline_mode = #tpu.pipeline_mode<synchronous>, transform_indices = @transform_1, window_bounds = array<i64: 16, 32>}, {pipeline_mode = #tpu.pipeline_mode<synchronous>, transform_indices = @transform_2, window_bounds = array<i64: 1, 32>}, {transform_indices = @transform_3, window_bounds = array<i64: 32, 32>}]} {
    %c0 = arith.constant 0 : index
    %c0_0 = arith.constant 0 : index
    %0 = vector.load %arg1[%c0, %c0_0] : memref<32x16xf32, #tpu.memory_space<vmem>>, vector<32x16xf32>
    %1 = arith.truncf %0 : vector<32x16xf32> to vector<32x16xbf16>
    %c0_1 = arith.constant 0 : index
    %c0_2 = arith.constant 0 : index
    %2 = vector.load %arg2[%c0_1, %c0_2] : memref<16x32xbf16, #tpu.memory_space<vmem>>, vector<16x32xbf16>
    %cst = arith.constant dense<0.000000e+00> : vector<32x32xf32>
    %3 = tpu.matmul %1, %2, %cst {dimension_numbers = #tpu.dot_dimension_numbers<[1], [0], [0], [1], [0, 0, 1, 1], [], []>} : vector<32x16xbf16>, vector<16x32xbf16>, vector<32x32xf32> -> vector<32x32xf32>
    %c0_3 = arith.constant 0 : index
    %c0_4 = arith.constant 0 : index
    %4 = vector.load %arg3[%c0_3, %c0_4] : memref<1x32xf32, #tpu.memory_space<vmem>>, vector<1x32xf32>
    %5 = vector.broadcast %4 : vector<1x32xf32> to vector<32x32xf32>
    %6 = arith.addf %3, %5 : vector<32x32xf32>
    %c0_5 = arith.constant 0 : index
    %c0_6 = arith.constant 0 : index
    %7 = vector.load %arg4[%c0_5, %c0_6] : memref<32x32xf32, #tpu.memory_space<vmem>>, vector<32x32xf32>
    tpu.vector_store %arg4[%c0_5, %c0_6], %6 {strides = array<i32>} : memref<32x32xf32, #tpu.memory_space<vmem>>, vector<32x32xf32>,
    return
  }
  func.func @transform_0(%arg0: i32) -> (i32, i32) {
    %c0_i32 = arith.constant 0 : i32
    %c0_i32_0 = arith.constant 0 : i32
    return %arg0, %c0_i32 : i32, i32
  }
  func.func @transform_1(%arg0: i32) -> (i32, i32) {
    %c0_i32 = arith.constant 0 : i32
    %c0_i32_0 = arith.constant 0 : i32
    %c0_i32_1 = arith.constant 0 : i32
    return %c0_i32, %c0_i32_0 : i32, i32
  }
  func.func @transform_2(%arg0: i32) -> (i32, i32) {
    %c0_i32 = arith.constant 0 : i32
    %c0_i32_0 = arith.constant 0 : i32
    %c0_i32_1 = arith.constant 0 : i32
    return %c0_i32, %c0_i32_0 : i32, i32
  }
  func.func @transform_3(%arg0: i32) -> (i32, i32) {
    %c0_i32 = arith.constant 0 : i32
    %c0_i32_0 = arith.constant 0 : i32
    return %arg0, %c0_i32 : i32, i32
  }
}

module attributes {stable_mosaic.version = 11 : i64} {
  func.func @_ln_matmul_kernel(%arg0: i32, %arg1: memref<48x32xf32, #tpu.memory_space<vmem>>, %arg2: memref<1x32xf32, #tpu.memory_space<vmem>>, %arg3: memref<1x32xf32, #tpu.memory_space<vmem>>, %arg4: memref<32x96xbf16, #tpu.memory_space<vmem>>, %arg5: memref<1x96xf32, #tpu.memory_space<vmem>>, %arg6: memref<48x96xbf16, #tpu.memory_space<vmem>>) attributes {dimension_semantics = [#tpu.dimension_semantics<parallel>], iteration_bounds = array<i64: 1>, scalar_prefetch = 0 : i64, scratch_operands = 0 : i64, tpu.core_type = #tpu.core_type<tc>, window_params = [{transform_indices = @transform_0, window_bounds = array<i64: 48, 32>}, {pipeline_mode = #tpu.pipeline_mode<synchronous>, transform_indices = @transform_1, window_bounds = array<i64: 1, 32>}, {pipeline_mode = #tpu.pipeline_mode<synchronous>, transform_indices = @transform_2, window_bounds = array<i64: 1, 32>}, {pipeline_mode = #tpu.pipeline_mode<synchronous>, transform_indices = @transform_3, window_bounds = array<i64: 32, 96>}, {pipeline_mode = #tpu.pipeline_mode<synchronous>, transform_indices = @transform_4, window_bounds = array<i64: 1, 96>}, {transform_indices = @transform_5, window_bounds = array<i64: 48, 96>}]} {
    %c0 = arith.constant 0 : index
    %c0_0 = arith.constant 0 : index
    %0 = vector.load %arg1[%c0, %c0_0] : memref<48x32xf32, #tpu.memory_space<vmem>>, vector<48x32xf32>
    %c0_1 = arith.constant 0 : index
    %c0_2 = arith.constant 0 : index
    %1 = vector.load %arg2[%c0_1, %c0_2] : memref<1x32xf32, #tpu.memory_space<vmem>>, vector<1x32xf32>
    %c0_3 = arith.constant 0 : index
    %c0_4 = arith.constant 0 : index
    %2 = vector.load %arg3[%c0_3, %c0_4] : memref<1x32xf32, #tpu.memory_space<vmem>>, vector<1x32xf32>
    %cst = arith.constant dense<0.000000e+00> : vector<48xf32>
    %3 = vector.multi_reduction <add>, %0, %cst [1] : vector<48x32xf32> to vector<48xf32>
    %4 = vector.shape_cast %3 : vector<48xf32> to vector<48x1xf32>
    %cst_5 = arith.constant 3.200000e+01 : f32
    %5 = vector.broadcast %cst_5 : f32 to vector<48x1xf32>
    %6 = arith.divf %4, %5 : vector<48x1xf32>
    %7 = vector.broadcast %6 : vector<48x1xf32> to vector<48x32xf32>
    %8 = arith.subf %0, %7 : vector<48x32xf32>
    %9 = arith.mulf %8, %8 : vector<48x32xf32>
    %cst_6 = arith.constant dense<0.000000e+00> : vector<48xf32>
    %10 = vector.multi_reduction <add>, %9, %cst_6 [1] : vector<48x32xf32> to vector<48xf32>
    %11 = vector.shape_cast %10 : vector<48xf32> to vector<48x1xf32>
    %cst_7 = arith.constant 3.200000e+01 : f32
    %12 = vector.broadcast %cst_7 : f32 to vector<48x1xf32>
    %13 = arith.divf %11, %12 : vector<48x1xf32>
    %14 = vector.broadcast %6 : vector<48x1xf32> to vector<48x32xf32>
    %15 = arith.subf %0, %14 : vector<48x32xf32>
    %cst_8 = arith.constant 9.99999996E-13 : f32
    %16 = vector.broadcast %cst_8 : f32 to vector<48x1xf32>
    %17 = arith.addf %13, %16 : vector<48x1xf32>
    %18 = math.rsqrt %17 : vector<48x1xf32>
    %19 = vector.broadcast %18 : vector<48x1xf32> to vector<48x32xf32>
    %20 = arith.mulf %15, %19 : vector<48x32xf32>
    %21 = vector.broadcast %1 : vector<1x32xf32> to vector<48x32xf32>
    %22 = arith.mulf %20, %21 : vector<48x32xf32>
    %23 = vector.broadcast %2 : vector<1x32xf32> to vector<48x32xf32>
    %24 = arith.addf %22, %23 : vector<48x32xf32>
    %25 = arith.truncf %24 : vector<48x32xf32> to vector<48x32xbf16>
    %c0_9 = arith.constant 0 : index
    %c0_10 = arith.constant 0 : index
    %26 = vector.load %arg4[%c0_9, %c0_10] : memref<32x96xbf16, #tpu.memory_space<vmem>>, vector<32x96xbf16>
    %cst_11 = arith.constant dense<0.000000e+00> : vector<48x96xf32>
    %27 = tpu.matmul %25, %26, %cst_11 {dimension_numbers = #tpu.dot_dimension_numbers<[1], [0], [0], [1], [0, 0, 1, 1], [], []>} : vector<48x32xbf16>, vector<32x96xbf16>, vector<48x96xf32> -> vector<48x96xf32>
    %c0_12 = arith.constant 0 : index
    %c0_13 = arith.constant 0 : index
    %28 = vector.load %arg5[%c0_12, %c0_13] : memref<1x96xf32, #tpu.memory_space<vmem>>, vector<1x96xf32>
    %29 = vector.broadcast %28 : vector<1x96xf32> to vector<48x96xf32>
    %30 = arith.addf %27, %29 : vector<48x96xf32>
    %31 = arith.truncf %30 : vector<48x96xf32> to vector<48x96xbf16>
    %c0_14 = arith.constant 0 : index
    %c0_15 = arith.constant 0 : index
    %32 = vector.load %arg6[%c0_14, %c0_15] : memref<48x96xbf16, #tpu.memory_space<vmem>>, vector<48x96xbf16>
    tpu.vector_store %arg6[%c0_14, %c0_15], %31 {strides = array<i32>} : memref<48x96xbf16, #tpu.memory_space<vmem>>, vector<48x96xbf16>,
    return
  }
  func.func @transform_0(%arg0: i32) -> (i32, i32) {
    %c0_i32 = arith.constant 0 : i32
    %c0_i32_0 = arith.constant 0 : i32
    return %arg0, %c0_i32 : i32, i32
  }
  func.func @transform_1(%arg0: i32) -> (i32, i32) {
    %c0_i32 = arith.constant 0 : i32
    %c0_i32_0 = arith.constant 0 : i32
    %c0_i32_1 = arith.constant 0 : i32
    return %c0_i32, %c0_i32_0 : i32, i32
  }
  func.func @transform_2(%arg0: i32) -> (i32, i32) {
    %c0_i32 = arith.constant 0 : i32
    %c0_i32_0 = arith.constant 0 : i32
    %c0_i32_1 = arith.constant 0 : i32
    return %c0_i32, %c0_i32_0 : i32, i32
  }
  func.func @transform_3(%arg0: i32) -> (i32, i32) {
    %c0_i32 = arith.constant 0 : i32
    %c0_i32_0 = arith.constant 0 : i32
    %c0_i32_1 = arith.constant 0 : i32
    return %c0_i32, %c0_i32_0 : i32, i32
  }
  func.func @transform_4(%arg0: i32) -> (i32, i32) {
    %c0_i32 = arith.constant 0 : i32
    %c0_i32_0 = arith.constant 0 : i32
    %c0_i32_1 = arith.constant 0 : i32
    return %c0_i32, %c0_i32_0 : i32, i32
  }
  func.func @transform_5(%arg0: i32) -> (i32, i32) {
    %c0_i32 = arith.constant 0 : i32
    %c0_i32_0 = arith.constant 0 : i32
    return %arg0, %c0_i32 : i32, i32
  }
}

module attributes {stable_mosaic.version = 11 : i64} {
  func.func @_attention_kernel(%arg0: i32, %arg1: i32, %arg2: i32, %arg3: memref<1x1x1x24x8xbf16, #tpu.memory_space<vmem>>, %arg4: memref<1x1x1x24x8xbf16, #tpu.memory_space<vmem>>, %arg5: memref<1x1x1x24x8xbf16, #tpu.memory_space<vmem>>, %arg6: memref<1x8x32xbf16, #tpu.memory_space<vmem>>, %arg7: memref<1x32xf32, #tpu.memory_space<vmem>>, %arg8: memref<1x24x32xf32, #tpu.memory_space<vmem>>, %arg9: memref<1x24x32xf32, #tpu.memory_space<vmem>>) attributes {dimension_semantics = [#tpu.dimension_semantics<parallel>, #tpu.dimension_semantics<parallel>, #tpu.dimension_semantics<arbitrary>], iteration_bounds = array<i64: 2, 1, 4>, scalar_prefetch = 0 : i64, scratch_operands = 0 : i64, tpu.core_type = #tpu.core_type<tc>, window_params = [{transform_indices = @transform_0, window_bounds = array<i64: 1, 1, 1, 24, 8>}, {transform_indices = @transform_1, window_bounds = array<i64: 1, 1, 1, 24, 8>}, {transform_indices = @transform_2, window_bounds = array<i64: 1, 1, 1, 24, 8>}, {transform_indices = @transform_3, window_bounds = array<i64: 1, 8, 32>}, {pipeline_mode = #tpu.pipeline_mode<synchronous>, transform_indices = @transform_4, window_bounds = array<i64: 1, 32>}, {transform_indices = @transform_5, window_bounds = array<i64: 1, 24, 32>}, {transform_indices = @transform_6, window_bounds = array<i64: 1, 24, 32>}]} {
    %c0_i32 = arith.constant 0 : i32
    %0 = arith.cmpi eq, %arg2, %c0_i32 : i32
    %1 = arith.extui %0 : i1 to i32
    %c0_i32_0 = arith.constant 0 : i32
    %2 = arith.cmpi ne, %1, %c0_i32_0 : i32
    scf.if %2 {
      %c0_30 = arith.constant 0 : index
      %c0_31 = arith.constant 0 : index
      %c0_32 = arith.constant 0 : index
      %39 = vector.load %arg8[%c0_30, %c0_31, %c0_32] : memref<1x24x32xf32, #tpu.memory_space<vmem>>, vector<1x24x32xf32>
      %40 = vector.shape_cast %39 : vector<1x24x32xf32> to vector<24x32xf32>
      %c0_33 = arith.constant 0 : index
      %c0_34 = arith.constant 0 : index
      %41 = vector.load %arg7[%c0_33, %c0_34] : memref<1x32xf32, #tpu.memory_space<vmem>>, vector<1x32xf32>
      %42 = vector.broadcast %41 : vector<1x32xf32> to vector<24x32xf32>
      %43 = arith.addf %40, %42 : vector<24x32xf32>
      %c0_35 = arith.constant 0 : index
      %c0_36 = arith.constant 0 : index
      %c0_37 = arith.constant 0 : index
      %44 = vector.load %arg9[%c0_35, %c0_36, %c0_37] : memref<1x24x32xf32, #tpu.memory_space<vmem>>, vector<1x24x32xf32>
      %45 = vector.shape_cast %44 : vector<1x24x32xf32> to vector<24x32xf32>
      %46 = vector.shape_cast %43 : vector<24x32xf32> to vector<1x24x32xf32>
      tpu.vector_store %arg9[%c0_35, %c0_36, %c0_37], %46 {strides = array<i32>} : memref<1x24x32xf32, #tpu.memory_space<vmem>>, vector<1x24x32xf32>,
    } else {
    }
    %c0 = arith.constant 0 : index
    %c0_1 = arith.constant 0 : index
    %c0_2 = arith.constant 0 : index
    %c0_3 = arith.constant 0 : index
    %c0_4 = arith.constant 0 : index
    %3 = vector.load %arg3[%c0, %c0_1, %c0_2, %c0_3, %c0_4] : memref<1x1x1x24x8xbf16, #tpu.memory_space<vmem>>, vector<1x1x1x24x8xbf16>
    %4 = vector.shape_cast %3 : vector<1x1x1x24x8xbf16> to vector<24x8xbf16>
    %c0_5 = arith.constant 0 : index
    %c0_6 = arith.constant 0 : index
    %c0_7 = arith.constant 0 : index
    %c0_8 = arith.constant 0 : index
    %c0_9 = arith.constant 0 : index
    %5 = vector.load %arg4[%c0_5, %c0_6, %c0_7, %c0_8, %c0_9] : memref<1x1x1x24x8xbf16, #tpu.memory_space<vmem>>, vector<1x1x1x24x8xbf16>
    %6 = vector.shape_cast %5 : vector<1x1x1x24x8xbf16> to vector<24x8xbf16>
    %c0_10 = arith.constant 0 : index
    %c0_11 = arith.constant 0 : index
    %c0_12 = arith.constant 0 : index
    %c0_13 = arith.constant 0 : index
    %c0_14 = arith.constant 0 : index
    %7 = vector.load %arg5[%c0_10, %c0_11, %c0_12, %c0_13, %c0_14] : memref<1x1x1x24x8xbf16, #tpu.memory_space<vmem>>, vector<1x1x1x24x8xbf16>
    %8 = vector.shape_cast %7 : vector<1x1x1x24x8xbf16> to vector<24x8xbf16>
    %cst = arith.constant dense<0.000000e+00> : vector<24x24xf32>
    %9 = tpu.matmul %4, %6, %cst {dimension_numbers = #tpu.dot_dimension_numbers<[1], [1], [0], [0], [0, 0, 1, 0], [], []>} : vector<24x8xbf16>, vector<24x8xbf16>, vector<24x24xf32> -> vector<24x24xf32>
    %cst_15 = arith.constant 0.353553385 : f32
    %10 = vector.broadcast %cst_15 : f32 to vector<24x24xf32>
    %11 = arith.mulf %9, %10 : vector<24x24xf32>
    %12 = tpu.iota {dimensions = array<i32: 1>} : vector<24x24xi32>
    %c18_i32 = arith.constant 18 : i32
    %13 = vector.broadcast %c18_i32 : i32 to vector<24x24xi32>
    %14 = arith.cmpi slt, %12, %13 : vector<24x24xi32>
    %cst_16 = arith.constant -1.000000e+30 : f32
    %15 = vector.broadcast %cst_16 : f32 to vector<24x24xf32>
    %16 = arith.select %14, %11, %15 : vector<24x24xi1>, vector<24x24xf32>
    %cst_17 = arith.constant dense<0xFF800000> : vector<24xf32>
    %17 = vector.multi_reduction <maximumf>, %16, %cst_17 [1] : vector<24x24xf32> to vector<24xf32>
    %18 = vector.shape_cast %17 : vector<24xf32> to vector<24x1xf32>
    %19 = vector.broadcast %18 : vector<24x1xf32> to vector<24x24xf32>
    %20 = arith.subf %16, %19 : vector<24x24xf32>
    %21 = math.exp %20 : vector<24x24xf32>
    %cst_18 = arith.constant dense<0.000000e+00> : vector<24xf32>
    %22 = vector.multi_reduction <add>, %21, %cst_18 [1] : vector<24x24xf32> to vector<24xf32>
    %23 = vector.shape_cast %22 : vector<24xf32> to vector<24x1xf32>
    %24 = tpu.reciprocal %23 {approx = true} : vector<24x1xf32> -> vector<24x1xf32>
    %25 = vector.broadcast %24 : vector<24x1xf32> to vector<24x24xf32>
    %26 = arith.mulf %21, %25 : vector<24x24xf32>
    %27 = arith.truncf %26 : vector<24x24xf32> to vector<24x24xbf16>
    %cst_19 = arith.constant dense<0.000000e+00> : vector<24x8xf32>
    %28 = tpu.matmul %27, %8, %cst_19 {dimension_numbers = #tpu.dot_dimension_numbers<[1], [0], [0], [1], [0, 0, 1, 1], [], []>} : vector<24x24xbf16>, vector<24x8xbf16>, vector<24x8xf32> -> vector<24x8xf32>
    %c0_20 = arith.constant 0 : index
    %c0_21 = arith.constant 0 : index
    %c0_22 = arith.constant 0 : index
    %29 = vector.load %arg9[%c0_20, %c0_21, %c0_22] : memref<1x24x32xf32, #tpu.memory_space<vmem>>, vector<1x24x32xf32>
    %30 = vector.shape_cast %29 : vector<1x24x32xf32> to vector<24x32xf32>
    %31 = arith.truncf %28 : vector<24x8xf32> to vector<24x8xbf16>
    %c0_23 = arith.constant 0 : index
    %c0_24 = arith.constant 0 : index
    %c0_25 = arith.constant 0 : index
    %32 = vector.load %arg6[%c0_23, %c0_24, %c0_25] : memref<1x8x32xbf16, #tpu.memory_space<vmem>>, vector<1x8x32xbf16>
    %33 = vector.shape_cast %32 : vector<1x8x32xbf16> to vector<8x32xbf16>
    %cst_26 = arith.constant dense<0.000000e+00> : vector<24x32xf32>
    %34 = tpu.matmul %31, %33, %cst_26 {dimension_numbers = #tpu.dot_dimension_numbers<[1], [0], [0], [1], [0, 0, 1, 1], [], []>} : vector<24x8xbf16>, vector<8x32xbf16>, vector<24x32xf32> -> vector<24x32xf32>
    %35 = arith.addf %30, %34 : vector<24x32xf32>
    %c0_27 = arith.constant 0 : index
    %c0_28 = arith.constant 0 : index
    %c0_29 = arith.constant 0 : index
    %36 = vector.load %arg9[%c0_27, %c0_28, %c0_29] : memref<1x24x32xf32, #tpu.memory_space<vmem>>, vector<1x24x32xf32>
    %37 = vector.shape_cast %36 : vector<1x24x32xf32> to vector<24x32xf32>
    %38 = vector.shape_cast %35 : vector<24x32xf32> to vector<1x24x32xf32>
    tpu.vector_store %arg9[%c0_27, %c0_28, %c0_29], %38 {strides = array<i32>} : memref<1x24x32xf32, #tpu.memory_space<vmem>>, vector<1x24x32xf32>,
    return
  }
  func.func @transform_0(%arg0: i32, %arg1: i32, %arg2: i32) -> (i32, i32, i32, i32, i32) {
    %c0_i32 = arith.constant 0 : i32
    %c0_i32_0 = arith.constant 0 : i32
    %c0_i32_1 = arith.constant 0 : i32
    return %arg0, %c0_i32, %arg2, %arg1, %c0_i32_0 : i32, i32, i32, i32, i32
  }
  func.func @transform_1(%arg0: i32, %arg1: i32, %arg2: i32) -> (i32, i32, i32, i32, i32) {
    %c1_i32 = arith.constant 1 : i32
    %c0_i32 = arith.constant 0 : i32
    %c0_i32_0 = arith.constant 0 : i32
    %c0_i32_1 = arith.constant 0 : i32
    return %arg0, %c1_i32, %arg2, %c0_i32, %c0_i32_0 : i32, i32, i32, i32, i32
  }
  func.func @transform_2(%arg0: i32, %arg1: i32, %arg2: i32) -> (i32, i32, i32, i32, i32) {
    %c2_i32 = arith.constant 2 : i32
    %c0_i32 = arith.constant 0 : i32
    %c0_i32_0 = arith.constant 0 : i32
    %c0_i32_1 = arith.constant 0 : i32
    return %arg0, %c2_i32, %arg2, %c0_i32, %c0_i32_0 : i32, i32, i32, i32, i32
  }
  func.func @transform_3(%arg0: i32, %arg1: i32, %arg2: i32) -> (i32, i32, i32) {
    %c0_i32 = arith.constant 0 : i32
    %c0_i32_0 = arith.constant 0 : i32
    %c0_i32_1 = arith.constant 0 : i32
    return %arg2, %c0_i32, %c0_i32_0 : i32, i32, i32
  }
  func.func @transform_4(%arg0: i32, %arg1: i32, %arg2: i32) -> (i32, i32) {
    %c0_i32 = arith.constant 0 : i32
    %c0_i32_0 = arith.constant 0 : i32
    %c0_i32_1 = arith.constant 0 : i32
    return %c0_i32, %c0_i32_0 : i32, i32
  }
  func.func @transform_5(%arg0: i32, %arg1: i32, %arg2: i32) -> (i32, i32, i32) {
    %c0_i32 = arith.constant 0 : i32
    %c0_i32_0 = arith.constant 0 : i32
    return %arg0, %arg1, %c0_i32 : i32, i32, i32
  }
  func.func @transform_6(%arg0: i32, %arg1: i32, %arg2: i32) -> (i32, i32, i32) {
    %c0_i32 = arith.constant 0 : i32
    %c0_i32_0 = arith.constant 0 : i32
    return %arg0, %arg1, %c0_i32 : i32, i32, i32
  }
}

module attributes {stable_mosaic.version = 11 : i64} {
  func.func @_matmul_res_kernel(%arg0: i32, %arg1: memref<48x64xbf16, #tpu.memory_space<vmem>>, %arg2: memref<64x32xbf16, #tpu.memory_space<vmem>>, %arg3: memref<1x32xf32, #tpu.memory_space<vmem>>, %arg4: memref<48x32xf32, #tpu.memory_space<vmem>>, %arg5: memref<48x32xf32, #tpu.memory_space<vmem>>) attributes {dimension_semantics = [#tpu.dimension_semantics<parallel>], iteration_bounds = array<i64: 1>, scalar_prefetch = 0 : i64, scratch_operands = 0 : i64, tpu.core_type = #tpu.core_type<tc>, window_params = [{transform_indices = @transform_0, window_bounds = array<i64: 48, 64>}, {pipeline_mode = #tpu.pipeline_mode<synchronous>, transform_indices = @transform_1, window_bounds = array<i64: 64, 32>}, {pipeline_mode = #tpu.pipeline_mode<synchronous>, transform_indices = @transform_2, window_bounds = array<i64: 1, 32>}, {transform_indices = @transform_3, window_bounds = array<i64: 48, 32>}, {transform_indices = @transform_4, window_bounds = array<i64: 48, 32>}]} {
    %c0 = arith.constant 0 : index
    %c0_0 = arith.constant 0 : index
    %0 = vector.load %arg1[%c0, %c0_0] : memref<48x64xbf16, #tpu.memory_space<vmem>>, vector<48x64xbf16>
    %c0_1 = arith.constant 0 : index
    %c0_2 = arith.constant 0 : index
    %1 = vector.load %arg2[%c0_1, %c0_2] : memref<64x32xbf16, #tpu.memory_space<vmem>>, vector<64x32xbf16>
    %cst = arith.constant dense<0.000000e+00> : vector<48x32xf32>
    %2 = tpu.matmul %0, %1, %cst {dimension_numbers = #tpu.dot_dimension_numbers<[1], [0], [0], [1], [0, 0, 1, 1], [], []>} : vector<48x64xbf16>, vector<64x32xbf16>, vector<48x32xf32> -> vector<48x32xf32>
    %c0_3 = arith.constant 0 : index
    %c0_4 = arith.constant 0 : index
    %3 = vector.load %arg3[%c0_3, %c0_4] : memref<1x32xf32, #tpu.memory_space<vmem>>, vector<1x32xf32>
    %4 = vector.broadcast %3 : vector<1x32xf32> to vector<48x32xf32>
    %5 = arith.addf %2, %4 : vector<48x32xf32>
    %c0_5 = arith.constant 0 : index
    %c0_6 = arith.constant 0 : index
    %6 = vector.load %arg4[%c0_5, %c0_6] : memref<48x32xf32, #tpu.memory_space<vmem>>, vector<48x32xf32>
    %7 = arith.addf %5, %6 : vector<48x32xf32>
    %c0_7 = arith.constant 0 : index
    %c0_8 = arith.constant 0 : index
    %8 = vector.load %arg5[%c0_7, %c0_8] : memref<48x32xf32, #tpu.memory_space<vmem>>, vector<48x32xf32>
    tpu.vector_store %arg5[%c0_7, %c0_8], %7 {strides = array<i32>} : memref<48x32xf32, #tpu.memory_space<vmem>>, vector<48x32xf32>,
    return
  }
  func.func @transform_0(%arg0: i32) -> (i32, i32) {
    %c0_i32 = arith.constant 0 : i32
    %c0_i32_0 = arith.constant 0 : i32
    return %arg0, %c0_i32 : i32, i32
  }
  func.func @transform_1(%arg0: i32) -> (i32, i32) {
    %c0_i32 = arith.constant 0 : i32
    %c0_i32_0 = arith.constant 0 : i32
    %c0_i32_1 = arith.constant 0 : i32
    return %c0_i32, %c0_i32_0 : i32, i32
  }
  func.func @transform_2(%arg0: i32) -> (i32, i32) {
    %c0_i32 = arith.constant 0 : i32
    %c0_i32_0 = arith.constant 0 : i32
    %c0_i32_1 = arith.constant 0 : i32
    return %c0_i32, %c0_i32_0 : i32, i32
  }
  func.func @transform_3(%arg0: i32) -> (i32, i32) {
    %c0_i32 = arith.constant 0 : i32
    %c0_i32_0 = arith.constant 0 : i32
    return %arg0, %c0_i32 : i32, i32
  }
  func.func @transform_4(%arg0: i32) -> (i32, i32) {
    %c0_i32 = arith.constant 0 : i32
    %c0_i32_0 = arith.constant 0 : i32
    return %arg0, %c0_i32 : i32, i32
  }
}

module attributes {stable_mosaic.version = 11 : i64} {
  func.func @_ln_matmul_gelu_kernel(%arg0: i32, %arg1: memref<48x32xf32, #tpu.memory_space<vmem>>, %arg2: memref<1x32xf32, #tpu.memory_space<vmem>>, %arg3: memref<1x32xf32, #tpu.memory_space<vmem>>, %arg4: memref<32x64xbf16, #tpu.memory_space<vmem>>, %arg5: memref<1x64xf32, #tpu.memory_space<vmem>>, %arg6: memref<48x64xbf16, #tpu.memory_space<vmem>>) attributes {dimension_semantics = [#tpu.dimension_semantics<parallel>], iteration_bounds = array<i64: 1>, scalar_prefetch = 0 : i64, scratch_operands = 0 : i64, tpu.core_type = #tpu.core_type<tc>, window_params = [{transform_indices = @transform_0, window_bounds = array<i64: 48, 32>}, {pipeline_mode = #tpu.pipeline_mode<synchronous>, transform_indices = @transform_1, window_bounds = array<i64: 1, 32>}, {pipeline_mode = #tpu.pipeline_mode<synchronous>, transform_indices = @transform_2, window_bounds = array<i64: 1, 32>}, {pipeline_mode = #tpu.pipeline_mode<synchronous>, transform_indices = @transform_3, window_bounds = array<i64: 32, 64>}, {pipeline_mode = #tpu.pipeline_mode<synchronous>, transform_indices = @transform_4, window_bounds = array<i64: 1, 64>}, {transform_indices = @transform_5, window_bounds = array<i64: 48, 64>}]} {
    %c0 = arith.constant 0 : index
    %c0_0 = arith.constant 0 : index
    %0 = vector.load %arg1[%c0, %c0_0] : memref<48x32xf32, #tpu.memory_space<vmem>>, vector<48x32xf32>
    %c0_1 = arith.constant 0 : index
    %c0_2 = arith.constant 0 : index
    %1 = vector.load %arg2[%c0_1, %c0_2] : memref<1x32xf32, #tpu.memory_space<vmem>>, vector<1x32xf32>
    %c0_3 = arith.constant 0 : index
    %c0_4 = arith.constant 0 : index
    %2 = vector.load %arg3[%c0_3, %c0_4] : memref<1x32xf32, #tpu.memory_space<vmem>>, vector<1x32xf32>
    %cst = arith.constant dense<0.000000e+00> : vector<48xf32>
    %3 = vector.multi_reduction <add>, %0, %cst [1] : vector<48x32xf32> to vector<48xf32>
    %4 = vector.shape_cast %3 : vector<48xf32> to vector<48x1xf32>
    %cst_5 = arith.constant 3.200000e+01 : f32
    %5 = vector.broadcast %cst_5 : f32 to vector<48x1xf32>
    %6 = arith.divf %4, %5 : vector<48x1xf32>
    %7 = vector.broadcast %6 : vector<48x1xf32> to vector<48x32xf32>
    %8 = arith.subf %0, %7 : vector<48x32xf32>
    %9 = arith.mulf %8, %8 : vector<48x32xf32>
    %cst_6 = arith.constant dense<0.000000e+00> : vector<48xf32>
    %10 = vector.multi_reduction <add>, %9, %cst_6 [1] : vector<48x32xf32> to vector<48xf32>
    %11 = vector.shape_cast %10 : vector<48xf32> to vector<48x1xf32>
    %cst_7 = arith.constant 3.200000e+01 : f32
    %12 = vector.broadcast %cst_7 : f32 to vector<48x1xf32>
    %13 = arith.divf %11, %12 : vector<48x1xf32>
    %14 = vector.broadcast %6 : vector<48x1xf32> to vector<48x32xf32>
    %15 = arith.subf %0, %14 : vector<48x32xf32>
    %cst_8 = arith.constant 9.99999996E-13 : f32
    %16 = vector.broadcast %cst_8 : f32 to vector<48x1xf32>
    %17 = arith.addf %13, %16 : vector<48x1xf32>
    %18 = math.rsqrt %17 : vector<48x1xf32>
    %19 = vector.broadcast %18 : vector<48x1xf32> to vector<48x32xf32>
    %20 = arith.mulf %15, %19 : vector<48x32xf32>
    %21 = vector.broadcast %1 : vector<1x32xf32> to vector<48x32xf32>
    %22 = arith.mulf %20, %21 : vector<48x32xf32>
    %23 = vector.broadcast %2 : vector<1x32xf32> to vector<48x32xf32>
    %24 = arith.addf %22, %23 : vector<48x32xf32>
    %25 = arith.truncf %24 : vector<48x32xf32> to vector<48x32xbf16>
    %c0_9 = arith.constant 0 : index
    %c0_10 = arith.constant 0 : index
    %26 = vector.load %arg4[%c0_9, %c0_10] : memref<32x64xbf16, #tpu.memory_space<vmem>>, vector<32x64xbf16>
    %cst_11 = arith.constant dense<0.000000e+00> : vector<48x64xf32>
    %27 = tpu.matmul %25, %26, %cst_11 {dimension_numbers = #tpu.dot_dimension_numbers<[1], [0], [0], [1], [0, 0, 1, 1], [], []>} : vector<48x32xbf16>, vector<32x64xbf16>, vector<48x64xf32> -> vector<48x64xf32>
    %c0_12 = arith.constant 0 : index
    %c0_13 = arith.constant 0 : index
    %28 = vector.load %arg5[%c0_12, %c0_13] : memref<1x64xf32, #tpu.memory_space<vmem>>, vector<1x64xf32>
    %29 = vector.broadcast %28 : vector<1x64xf32> to vector<48x64xf32>
    %30 = arith.addf %27, %29 : vector<48x64xf32>
    %cst_14 = arith.constant 0.707106769 : f32
    %31 = vector.broadcast %cst_14 : f32 to vector<48x64xf32>
    %32 = arith.mulf %30, %31 : vector<48x64xf32>
    %33 = math.absf %32 : vector<48x64xf32>
    %cst_15 = arith.constant 0.327591091 : f32
    %34 = vector.broadcast %cst_15 : f32 to vector<48x64xf32>
    %35 = arith.mulf %34, %33 : vector<48x64xf32>
    %cst_16 = arith.constant 1.000000e+00 : f32
    %36 = vector.broadcast %cst_16 : f32 to vector<48x64xf32>
    %37 = arith.addf %36, %35 : vector<48x64xf32>
    %cst_17 = arith.constant 1.000000e+00 : f32
    %38 = vector.broadcast %cst_17 : f32 to vector<48x64xf32>
    %39 = arith.divf %38, %37 : vector<48x64xf32>
    %cst_18 = arith.constant 1.06140542 : f32
    %40 = vector.broadcast %cst_18 : f32 to vector<48x64xf32>
    %41 = arith.mulf %39, %40 : vector<48x64xf32>
    %cst_19 = arith.constant -1.45315206 : f32
    %42 = vector.broadcast %cst_19 : f32 to vector<48x64xf32>
    %43 = arith.addf %42, %41 : vector<48x64xf32>
    %44 = arith.mulf %39, %43 : vector<48x64xf32>
    %cst_20 = arith.constant 1.42141378 : f32
    %45 = vector.broadcast %cst_20 : f32 to vector<48x64xf32>
    %46 = arith.addf %45, %44 : vector<48x64xf32>
    %47 = arith.mulf %39, %46 : vector<48x64xf32>
    %cst_21 = arith.constant -0.284496725 : f32
    %48 = vector.broadcast %cst_21 : f32 to vector<48x64xf32>
    %49 = arith.addf %48, %47 : vector<48x64xf32>
    %50 = arith.mulf %39, %49 : vector<48x64xf32>
    %cst_22 = arith.constant 0.254829586 : f32
    %51 = vector.broadcast %cst_22 : f32 to vector<48x64xf32>
    %52 = arith.addf %51, %50 : vector<48x64xf32>
    %53 = arith.mulf %39, %52 : vector<48x64xf32>
    %cst_23 = arith.constant 0.000000e+00 : f32
    %54 = vector.broadcast %cst_23 : f32 to vector<48x64xf32>
    %55 = arith.subf %54, %33 : vector<48x64xf32>
    %56 = arith.mulf %55, %33 : vector<48x64xf32>
    %57 = math.exp %56 : vector<48x64xf32>
    %58 = arith.mulf %53, %57 : vector<48x64xf32>
    %cst_24 = arith.constant 1.000000e+00 : f32
    %59 = vector.broadcast %cst_24 : f32 to vector<48x64xf32>
    %60 = arith.subf %59, %58 : vector<48x64xf32>
    %cst_25 = arith.constant 0.000000e+00 : f32
    %61 = vector.broadcast %cst_25 : f32 to vector<48x64xf32>
    %62 = arith.cmpf oge, %32, %61 : vector<48x64xf32>
    %cst_26 = arith.constant 0.000000e+00 : f32
    %63 = vector.broadcast %cst_26 : f32 to vector<48x64xf32>
    %64 = arith.subf %63, %60 : vector<48x64xf32>
    %65 = arith.select %62, %60, %64 : vector<48x64xi1>, vector<48x64xf32>
    %cst_27 = arith.constant 5.000000e-01 : f32
    %66 = vector.broadcast %cst_27 : f32 to vector<48x64xf32>
    %67 = arith.mulf %66, %30 : vector<48x64xf32>
    %cst_28 = arith.constant 1.000000e+00 : f32
    %68 = vector.broadcast %cst_28 : f32 to vector<48x64xf32>
    %69 = arith.addf %68, %65 : vector<48x64xf32>
    %70 = arith.mulf %67, %69 : vector<48x64xf32>
    %71 = arith.truncf %70 : vector<48x64xf32> to vector<48x64xbf16>
    %c0_29 = arith.constant 0 : index
    %c0_30 = arith.constant 0 : index
    %72 = vector.load %arg6[%c0_29, %c0_30] : memref<48x64xbf16, #tpu.memory_space<vmem>>, vector<48x64xbf16>
    tpu.vector_store %arg6[%c0_29, %c0_30], %71 {strides = array<i32>} : memref<48x64xbf16, #tpu.memory_space<vmem>>, vector<48x64xbf16>,
    return
  }
  func.func @transform_0(%arg0: i32) -> (i32, i32) {
    %c0_i32 = arith.constant 0 : i32
    %c0_i32_0 = arith.constant 0 : i32
    return %arg0, %c0_i32 : i32, i32
  }
  func.func @transform_1(%arg0: i32) -> (i32, i32) {
    %c0_i32 = arith.constant 0 : i32
    %c0_i32_0 = arith.constant 0 : i32
    %c0_i32_1 = arith.constant 0 : i32
    return %c0_i32, %c0_i32_0 : i32, i32
  }
  func.func @transform_2(%arg0: i32) -> (i32, i32) {
    %c0_i32 = arith.constant 0 : i32
    %c0_i32_0 = arith.constant 0 : i32
    %c0_i32_1 = arith.constant 0 : i32
    return %c0_i32, %c0_i32_0 : i32, i32
  }
  func.func @transform_3(%arg0: i32) -> (i32, i32) {
    %c0_i32 = arith.constant 0 : i32
    %c0_i32_0 = arith.constant 0 : i32
    %c0_i32_1 = arith.constant 0 : i32
    return %c0_i32, %c0_i32_0 : i32, i32
  }
  func.func @transform_4(%arg0: i32) -> (i32, i32) {
    %c0_i32 = arith.constant 0 : i32
    %c0_i32_0 = arith.constant 0 : i32
    %c0_i32_1 = arith.constant 0 : i32
    return %c0_i32, %c0_i32_0 : i32, i32
  }
  func.func @transform_5(%arg0: i32) -> (i32, i32) {
    %c0_i32 = arith.constant 0 : i32
    %c0_i32_0 = arith.constant 0 : i32
    return %arg0, %c0_i32 : i32, i32
  }
}

</mosaic_0001>

<llo_original>
// kernel: ast_forward.9
$region0: #{ast_forward.9}
  #allocation0 [shape = 'u32[]', space=smem, size = 0x4, offset = 0x4, fixed_abs, tag = 'smem constant byte address 0x4 - core index']
  #allocation1 [shape = 'u32[144,128]{1,0:T(1,128)}', space=vmem, size = 0x12000, scoped, tag = 'internal scratch']
  %s0 = inlined_call_operand.hbm [shape: f32[32,16], index: 0, kind: input, shape index: {}]
  %s1 = inlined_call_operand.hbm [shape: bf16[16,32], index: 1, kind: input, shape index: {}]
  %s2 = inlined_call_operand.hbm [shape: f32[1,32], index: 2, kind: input, shape index: {}]
  %s3 = inlined_call_operand.hbm [shape: f32[32,32], index: 3, kind: output, shape index: {}]
  %s4 = sld [smem:[#allocation0]]
  $region34: #{ast_forward.9} parent=0
    _
  %s6 = ssub.s32 1, %s4
  %s7 = scalar_select 0, %s6, %s4
  $region1: #{ast_forward.9} parent=0
    #allocation2 [shape = 'u8[16384]{0}', space=vmem, size = 0x4000, scoped, tag = 'input window, operand 0, single buffered']
    #allocation3 [shape = 's32[1]{0}', space=sflag, size = 0x4, scoped, tag = 'scoped memory for ast_forward.9']
    #allocation4 [shape = 's32[1]{0}', space=sflag, size = 0x4, scoped, tag = 'scoped memory for ast_forward.9']
    #allocation5 [shape = 'u8[4096]{0}', space=vmem, size = 0x1000, scoped, tag = 'input window, operand 1, single buffered']
    #allocation6 [shape = 's32[1]{0}', space=sflag, size = 0x4, scoped, tag = 'scoped memory for ast_forward.9']
    #allocation7 [shape = 'u8[512]{0}', space=vmem, size = 0x400, scoped, tag = 'input window, operand 2, single buffered']
    #allocation8 [shape = 'u8[16384]{0}', space=vmem, size = 0x4000, scoped, tag = 'output window, operand 0, single buffered']
    %8 = vsyncpa [#allocation3], 0
    %9 = vsyncpa [#allocation6], 0
    %10 = vsyncpa [#allocation4], 0
    // Predicated region
    $region2: #{ast_forward.9} parent=1 // pred_check
      _
    $region3: #{ast_forward.9} parent=1 // pred_check_branch
      %12 = sbr.rel (0) target = $region5
    $region4: #{ast_forward.9} parent=1 // pred_region
      %s14 = ssub.s32 512, 512
      %15 = vsyncadd [#allocation3], %s14
      %s16 = sshll.u32 [#allocation2], 4
      %s17 = int_to_ptr.vmem [resolvable:$true] %s16
      %22 = dma.hbm_to_vmem [thread:$0]  %s0, 512, %s17, [#allocation3], 128, 128, 8
    $region5: #{ast_forward.9} parent=1 // pred_fallthru
      _
    // Predicated region
    $region6: #{ast_forward.9} parent=1 // pred_check
      _
    $region7: #{ast_forward.9} parent=1 // pred_check_branch
      %24 = sbr.rel (0) target = $region9
    $region8: #{ast_forward.9} parent=1 // pred_region
      %s26 = ssub.s32 128, 128
      %27 = vsyncadd [#allocation6], %s26
      %s28 = sshll.u32 [#allocation5], 4
      %s29 = int_to_ptr.vmem [resolvable:$true] %s28
      %34 = dma.hbm_to_vmem [thread:$0]  %s1, 128, %s29, [#allocation6], 64, 64, 4
    $region9: #{ast_forward.9} parent=1 // pred_fallthru
      _
    // Predicated region
    $region10: #{ast_forward.9} parent=1 // pred_check
      _
    $region11: #{ast_forward.9} parent=1 // pred_check_branch
      %36 = sbr.rel (0) target = $region13
    $region12: #{ast_forward.9} parent=1 // pred_region
      %s38 = ssub.s32 16, 16
      %39 = vsyncadd [#allocation6], %s38
      %s41 = sshll.u32 [#allocation7], 4
      %s42 = int_to_ptr.vmem [resolvable:$true] %s41
      %44 = dma.hbm_to_vmem [thread:$0]  %s2, 16, %s42, [#allocation6]
    $region13: #{ast_forward.9} parent=1 // pred_fallthru
      _
    // Predicated region
    $region14: #{ast_forward.9} parent=1 // pred_check
      _
    $region15: #{ast_forward.9} parent=1 // pred_check_branch
      %46 = sbr.rel (0) target = $region17
    $region16: #{ast_forward.9} parent=1 // pred_region
      %47 = dma.done [#allocation3], 512
    $region17: #{ast_forward.9} parent=1 // pred_fallthru
      _
    // Predicated region
    $region18: #{ast_forward.9} parent=1 // pred_check
      _
    $region19: #{ast_forward.9} parent=1 // pred_check_branch
      %49 = sbr.rel (0) target = $region21
    $region20: #{ast_forward.9} parent=1 // pred_region
      %50 = dma.done [#allocation6], 128
    $region21: #{ast_forward.9} parent=1 // pred_fallthru
      _
    // Predicated region
    $region22: #{ast_forward.9} parent=1 // pred_check
      _
    $region23: #{ast_forward.9} parent=1 // pred_check_branch
      %52 = sbr.rel (0) target = $region25
    $region24: #{ast_forward.9} parent=1 // pred_region
      %53 = dma.done [#allocation6], 16
    $region25: #{ast_forward.9} parent=1 // pred_fallthru
      _
    %v55 = vld [vmem:[#allocation2] sm:$0xff]
    %v56 = vld [vmem:[#allocation2 + $0x8] sm:$0xff]
    %v57 = vld [vmem:[#allocation2 + $0x10] sm:$0xff]
    %v58 = vld [vmem:[#allocation2 + $0x18] sm:$0xff]
    %v59 = vpack.c.bf16 %v56, %v55
    %v60 = vpack.c.bf16 %v58, %v57
    %v61 = vld [vmem:[#allocation5] sm:$0xf]
    %v62 = vld [vmem:[#allocation5 + $0x4] sm:$0xf]
    %v63 = vld [vmem:[#allocation7] sm:$0x1]
    %v65 = vlaneseq
    %v66 = vshrl.u32 %v65, 7
    %v67 = vsub.s32 0, %v66
    %v68 = vrot.slane %v63, %v67
    %v72 = vunpack.c.l.b16 %v61
    %v73 = vunpack.c.l.b16 %v62
    %v74 = vpack.c.b16 %v73, %v72
    %vm76 = vcmask 130048
    %v78 = vsel %vm76, %v59, 0
    %v81 = vsel %vm76, %v60, 0
    %83 = vmatprep.subr.bf16.mxu0 0
    %84 = vmatpush1.bf16.msra.mxu0 %v74
    %85 = vmatprep.subr.bf16.mxu0 0
    %86 = vmatpush1.bf16.msra.mxu0 0
    %87 = vmatprep.subr.bf16.mxu0 0
    %88 = vmatpush1.bf16.msra.mxu0 0
    %89 = vmatprep.subr.bf16.mxu0 0
    %90 = vmatpush1.bf16.msra.mxu0 0
    %91 = vmatprep.subr.bf16.mxu0 0
    %92 = vmatpush1.bf16.msra.mxu0 0
    %93 = vmatprep.subr.bf16.mxu0 0
    %94 = vmatpush1.bf16.msra.mxu0 0
    %95 = vmatprep.subr.bf16.mxu0 0
    %96 = vmatpush1.bf16.msra.mxu0 0
    %97 = vmatprep.subr.bf16.mxu0 0
    %98 = vmatpush1.bf16.msra.mxu0 0
    %99 = vmatprep.subr.bf16.mxu0 0
    %100 = vmatpush1.bf16.msra.mxu0 0
    %101 = vmatprep.subr.bf16.mxu0 0
    %102 = vmatpush1.bf16.msra.mxu0 0
    %103 = vmatprep.subr.bf16.mxu0 0
    %104 = vmatpush1.bf16.msra.mxu0 0
    %105 = vmatprep.subr.bf16.mxu0 0
    %106 = vmatpush1.bf16.msra.mxu0 0
    %107 = vmatprep.subr.bf16.mxu0 0
    %108 = vmatpush1.bf16.msra.mxu0 0
    %109 = vmatprep.subr.bf16.mxu0 0
    %110 = vmatpush1.bf16.msra.mxu0 0
    %111 = vmatprep.subr.bf16.mxu0 0
    %112 = vmatpush1.bf16.msra.mxu0 0
    %113 = vmatprep.subr.bf16.mxu0 0
    %114 = vmatpush1.bf16.msra.mxu0 0
    %115 = vmatprep.mubr.bf16.mxu0 0
    %116 = vmatmul.mubr.bf16.gmra.mrb[0].mxu0 %v78
    %v117 = vpop.f32.mrb[0].mxu0
    %v118 = vadd.f32 %v68, %v117
    %v119 = vpop.f32.mrb[0].mxu0
    %v120 = vpop.f32.mrb[0].mxu0
    %v121 = vadd.f32 %v68, %v120
    %v122 = vpop.f32.mrb[0].mxu0
    %123 = vmatprep.mubr.bf16.mxu0 0
    %124 = vmatmul.mubr.bf16.gmra.mrb[0].mxu0 %v81
    %v125 = vpop.f32.mrb[0].mxu0
    %v126 = vadd.f32 %v68, %v125
    %v127 = vpop.f32.mrb[0].mxu0
    %v128 = vpop.f32.mrb[0].mxu0
    %v129 = vadd.f32 %v68, %v128
    %v130 = vpop.f32.mrb[0].mxu0
    %131 = vdwg.mxu0
    %vm132 = vcmask 261120
    %133 = vst.msk [vmem:[#allocation8] sm:$0xff] %vm132, %v118
    %134 = vst.msk [vmem:[#allocation8 + $0x8] sm:$0xff] %vm132, %v121
    %135 = vst.msk [vmem:[#allocation8 + $0x10] sm:$0xff] %vm132, %v126
    %136 = vst.msk [vmem:[#allocation8 + $0x18] sm:$0xff] %vm132, %v129
    // Predicated region
    $region26: #{ast_forward.9} parent=1 // pred_check
      _
    $region27: #{ast_forward.9} parent=1 // pred_check_branch
      %138 = sbr.rel (0) target = $region29
    $region28: #{ast_forward.9} parent=1 // pred_region
      %s140 = ssub.s32 512, 512
      %141 = vsyncadd [#allocation4], %s140
      %s142 = sshll.u32 [#allocation8], 4
      %s143 = int_to_ptr.vmem [resolvable:$true] %s142
      %148 = dma.vmem_to_hbm [thread:$0]  %s143, 512, %s3, [#allocation4], 128, 128, 8
    $region29: #{ast_forward.9} parent=1 // pred_fallthru
      _
    // Predicated region
    $region30: #{ast_forward.9} parent=1 // pred_check
      _
    $region31: #{ast_forward.9} parent=1 // pred_check_branch
      %150 = sbr.rel (0) target = $region33
    $region32: #{ast_forward.9} parent=1 // pred_region
      %151 = dma.done [#allocation4], 512
    $region33: #{ast_forward.9} parent=1 // pred_fallthru
      _
    %152 = vsyncpa [#allocation3], 1
    %153 = vsyncpa [#allocation6], 1
    %154 = vsyncpa [#allocation4], 1

// kernel: ast_forward.10
$region0: #{ast_forward.10}
  #allocation0 [shape = 'u32[]', space=smem, size = 0x4, offset = 0x4, fixed_abs, tag = 'smem constant byte address 0x4 - core index']
  #allocation1 [shape = 'u32[144,128]{1,0:T(1,128)}', space=vmem, size = 0x12000, scoped, tag = 'internal scratch']
  %s0 = inlined_call_operand.hbm [shape: f32[48,32], index: 0, kind: input, shape index: {}]
  %s1 = inlined_call_operand.hbm [shape: f32[1,32], index: 1, kind: input, shape index: {}]
  %s2 = inlined_call_operand.hbm [shape: f32[1,32], index: 2, kind: input, shape index: {}]
  %s3 = inlined_call_operand.hbm [shape: bf16[32,96], index: 3, kind: input, shape index: {}]
  %s4 = inlined_call_operand.hbm [shape: f32[1,96], index: 4, kind: input, shape index: {}]
  %s5 = inlined_call_operand.hbm [shape: bf16[48,96], index: 5, kind: output, shape index: {}]
  %s6 = sld [smem:[#allocation0]]
  $region50: #{ast_forward.10} parent=0
    _
  %s8 = ssub.s32 1, %s6
  %s9 = scalar_select 0, %s8, %s6
  $region1: #{ast_forward.10} parent=0
    #allocation2 [shape = 'u8[24576]{0}', space=vmem, size = 0x6000, scoped, tag = 'input window, operand 0, single buffered']
    #allocation3 [shape = 's32[1]{0}', space=sflag, size = 0x4, scoped, tag = 'scoped memory for ast_forward.10']
    #allocation4 [shape = 's32[1]{0}', space=sflag, size = 0x4, scoped, tag = 'scoped memory for ast_forward.10']
    #allocation5 [shape = 'u8[512]{0}', space=vmem, size = 0x400, scoped, tag = 'input window, operand 1, single buffered']
    #allocation6 [shape = 's32[1]{0}', space=sflag, size = 0x4, scoped, tag = 'scoped memory for ast_forward.10']
    #allocation7 [shape = 'u8[512]{0}', space=vmem, size = 0x400, scoped, tag = 'input window, operand 2, single buffered']
    #allocation8 [shape = 'u8[8192]{0}', space=vmem, size = 0x2000, scoped, tag = 'input window, operand 3, single buffered']
    #allocation9 [shape = 's32[1]{0}', space=sflag, size = 0x4, scoped, tag = 'scoped memory for ast_forward.10']
    #allocation10 [shape = 'u8[512]{0}', space=vmem, size = 0x400, scoped, tag = 'input window, operand 4, single buffered']
    #allocation11 [shape = 'u8[12288]{0}', space=vmem, size = 0x3000, scoped, tag = 'output window, operand 0, single buffered']
    %10 = vsyncpa [#allocation3], 0
    %11 = vsyncpa [#allocation6], 0
    %12 = vsyncpa [#allocation9], 0
    %13 = vsyncpa [#allocation4], 0
    // Predicated region
    $region2: #{ast_forward.10} parent=1 // pred_check
      _
    $region3: #{ast_forward.10} parent=1 // pred_check_branch
      %15 = sbr.rel (0) target = $region5
    $region4: #{ast_forward.10} parent=1 // pred_region
      %s17 = ssub.s32 768, 768
      %18 = vsyncadd [#allocation3], %s17
      %s19 = sshll.u32 [#allocation2], 4
      %s20 = int_to_ptr.vmem [resolvable:$true] %s19
      %25 = dma.hbm_to_vmem [thread:$0]  %s0, 768, %s20, [#allocation3], 128, 128, 8
    $region5: #{ast_forward.10} parent=1 // pred_fallthru
      _
    // Predicated region
    $region6: #{ast_forward.10} parent=1 // pred_check
      _
    $region7: #{ast_forward.10} parent=1 // pred_check_branch
      %27 = sbr.rel (0) target = $region9
    $region8: #{ast_forward.10} parent=1 // pred_region
      %s29 = ssub.s32 16, 16
      %30 = vsyncadd [#allocation6], %s29
      %s32 = sshll.u32 [#allocation5], 4
      %s33 = int_to_ptr.vmem [resolvable:$true] %s32
      %35 = dma.hbm_to_vmem [thread:$0]  %s1, 16, %s33, [#allocation6]
    $region9: #{ast_forward.10} parent=1 // pred_fallthru
      _
    // Predicated region
    $region10: #{ast_forward.10} parent=1 // pred_check
      _
    $region11: #{ast_forward.10} parent=1 // pred_check_branch
      %37 = sbr.rel (0) target = $region13
    $region12: #{ast_forward.10} parent=1 // pred_region
      %s39 = ssub.s32 16, 16
      %40 = vsyncadd [#allocation6], %s39
      %s42 = sshll.u32 [#allocation7], 4
      %s43 = int_to_ptr.vmem [resolvable:$true] %s42
      %45 = dma.hbm_to_vmem [thread:$0]  %s2, 16, %s43, [#allocation6]
    $region13: #{ast_forward.10} parent=1 // pred_fallthru
      _
    // Predicated region
    $region14: #{ast_forward.10} parent=1 // pred_check
      _
    $region15: #{ast_forward.10} parent=1 // pred_check_branch
      %47 = sbr.rel (0) target = $region17
    $region16: #{ast_forward.10} parent=1 // pred_region
      %s49 = ssub.s32 256, 256
      %50 = vsyncadd [#allocation9], %s49
      %s51 = sshll.u32 [#allocation8], 4
      %s52 = int_to_ptr.vmem [resolvable:$true] %s51
      %57 = dma.hbm_to_vmem [thread:$0]  %s3, 256, %s52, [#allocation9], 64, 64, 4
    $region17: #{ast_forward.10} parent=1 // pred_fallthru
      _
    // Predicated region
    $region18: #{ast_forward.10} parent=1 // pred_check
      _
    $region19: #{ast_forward.10} parent=1 // pred_check_branch
      %59 = sbr.rel (0) target = $region21
    $region20: #{ast_forward.10} parent=1 // pred_region
      %s61 = ssub.s32 16, 16
      %62 = vsyncadd [#allocation9], %s61
      %s64 = sshll.u32 [#allocation10], 4
      %s65 = int_to_ptr.vmem [resolvable:$true] %s64
      %67 = dma.hbm_to_vmem [thread:$0]  %s4, 16, %s65, [#allocation9]
    $region21: #{ast_forward.10} parent=1 // pred_fallthru
      _
    // Predicated region
    $region22: #{ast_forward.10} parent=1 // pred_check
      _
    $region23: #{ast_forward.10} parent=1 // pred_check_branch
      %69 = sbr.rel (0) target = $region25
    $region24: #{ast_forward.10} parent=1 // pred_region
      %70 = dma.done [#allocation3], 768
    $region25: #{ast_forward.10} parent=1 // pred_fallthru
      _
    // Predicated region
    $region26: #{ast_forward.10} parent=1 // pred_check
      _
    $region27: #{ast_forward.10} parent=1 // pred_check_branch
      %72 = sbr.rel (0) target = $region29
    $region28: #{ast_forward.10} parent=1 // pred_region
      %73 = dma.done [#allocation6], 16
    $region29: #{ast_forward.10} parent=1 // pred_fallthru
      _
    // Predicated region
    $region30: #{ast_forward.10} parent=1 // pred_check
      _
    $region31: #{ast_forward.10} parent=1 // pred_check_branch
      %75 = sbr.rel (0) target = $region33
    $region32: #{ast_forward.10} parent=1 // pred_region
      %76 = dma.done [#allocation6], 16
    $region33: #{ast_forward.10} parent=1 // pred_fallthru
      _
    // Predicated region
    $region34: #{ast_forward.10} parent=1 // pred_check
      _
    $region35: #{ast_forward.10} parent=1 // pred_check_branch
      %78 = sbr.rel (0) target = $region37
    $region36: #{ast_forward.10} parent=1 // pred_region
      %79 = dma.done [#allocation9], 256
    $region37: #{ast_forward.10} parent=1 // pred_fallthru
      _
    // Predicated region
    $region38: #{ast_forward.10} parent=1 // pred_check
      _
    $region39: #{ast_forward.10} parent=1 // pred_check_branch
      %81 = sbr.rel (0) target = $region41
    $region40: #{ast_forward.10} parent=1 // pred_region
      %82 = dma.done [#allocation9], 16
    $region41: #{ast_forward.10} parent=1 // pred_fallthru
      _
    %v84 = vld [vmem:[#allocation2] sm:$0xff]
    %v85 = vld [vmem:[#allocation2 + $0x8] sm:$0xff]
    %v86 = vld [vmem:[#allocation2 + $0x10] sm:$0xff]
    %v87 = vld [vmem:[#allocation2 + $0x18] sm:$0xff]
    %v88 = vld [vmem:[#allocation2 + $0x20] sm:$0xff]
    %v89 = vld [vmem:[#allocation2 + $0x28] sm:$0xff]
    %v90 = vld [vmem:[#allocation5] sm:$0x1]
    %v91 = vld [vmem:[#allocation7] sm:$0x1]
    %vm92 = vcmask 261120
    %v93 = vsel %vm92, %v84, 0.0
    %94 = vadd.xlane.f32.xlu0 %v93
    %v95 = vpop.xlane.xlu0 %94
    %v96 = vsel %vm92, %v85, 0.0
    %97 = vadd.xlane.f32.xlu0 %v96
    %v98 = vpop.xlane.xlu0 %97
    %v99 = vsel %vm92, %v86, 0.0
    %100 = vadd.xlane.f32.xlu0 %v99
    %v101 = vpop.xlane.xlu0 %100
    %v102 = vsel %vm92, %v87, 0.0
    %103 = vadd.xlane.f32.xlu0 %v102
    %v104 = vpop.xlane.xlu0 %103
    %v105 = vsel %vm92, %v88, 0.0
    %106 = vadd.xlane.f32.xlu0 %v105
    %v107 = vpop.xlane.xlu0 %106
    %v108 = vsel %vm92, %v89, 0.0
    %109 = vadd.xlane.f32.xlu0 %v108
    %v110 = vpop.xlane.xlu0 %109
    %v111 = vrcp.pop 32.0
    %v112 = vmul.f32 %v95, %v111
    %v113 = vmul.f32 %v98, %v111
    %v114 = vmul.f32 %v101, %v111
    %v115 = vmul.f32 %v104, %v111
    %v116 = vmul.f32 %v107, %v111
    %v117 = vmul.f32 %v110, %v111
    %v118 = vsub.f32 %v84, %v112
    %v119 = vsub.f32 %v85, %v113
    %v120 = vsub.f32 %v86, %v114
    %v121 = vsub.f32 %v87, %v115
    %v122 = vsub.f32 %v88, %v116
    %v123 = vsub.f32 %v89, %v117
    %v124 = vmul.f32 %v118, %v118
    %v125 = vmul.f32 %v119, %v119
    %v126 = vmul.f32 %v120, %v120
    %v127 = vmul.f32 %v121, %v121
    %v128 = vmul.f32 %v122, %v122
    %v129 = vmul.f32 %v123, %v123
    %v130 = vsel %vm92, %v124, 0.0
    %131 = vadd.xlane.f32.xlu0 %v130
    %v132 = vpop.xlane.xlu0 %131
    %v133 = vsel %vm92, %v125, 0.0
    %134 = vadd.xlane.f32.xlu0 %v133
    %v135 = vpop.xlane.xlu0 %134
    %v136 = vsel %vm92, %v126, 0.0
    %137 = vadd.xlane.f32.xlu0 %v136
    %v138 = vpop.xlane.xlu0 %137
    %v139 = vsel %vm92, %v127, 0.0
    %140 = vadd.xlane.f32.xlu0 %v139
    %v141 = vpop.xlane.xlu0 %140
    %v142 = vsel %vm92, %v128, 0.0
    %143 = vadd.xlane.f32.xlu0 %v142
    %v144 = vpop.xlane.xlu0 %143
    %v145 = vsel %vm92, %v129, 0.0
    %146 = vadd.xlane.f32.xlu0 %v145
    %v147 = vpop.xlane.xlu0 %146
    %v148 = vmul.f32 %v132, %v111
    %v149 = vmul.f32 %v135, %v111
    %v150 = vmul.f32 %v138, %v111
    %v151 = vmul.f32 %v141, %v111
    %v152 = vmul.f32 %v144, %v111
    %v153 = vmul.f32 %v147, %v111
    %v154 = vadd.f32 %v148, 1e-12
    %v155 = vadd.f32 %v149, 1e-12
    %v156 = vadd.f32 %v150, 1e-12
    %v157 = vadd.f32 %v151, 1e-12
    %v158 = vadd.f32 %v152, 1e-12
    %v159 = vadd.f32 %v153, 1e-12
    %v160 = vrsqrt.pop %v154
    %v161 = vrsqrt.pop %v155
    %v162 = vrsqrt.pop %v156
    %v163 = vrsqrt.pop %v157
    %v164 = vrsqrt.pop %v158
    %v165 = vrsqrt.pop %v159
    %v166 = vmul.f32 %v118, %v160
    %v167 = vmul.f32 %v119, %v161
    %v168 = vmul.f32 %v120, %v162
    %v169 = vmul.f32 %v121, %v163
    %v170 = vmul.f32 %v122, %v164
    %v171 = vmul.f32 %v123, %v165
    %v173 = vlaneseq
    %v174 = vshrl.u32 %v173, 7
    %v175 = vsub.s32 0, %v174
    %v176 = vrot.slane %v90, %v175
    %v178 = vmul.f32 %v166, %v176
    %v179 = vmul.f32 %v167, %v176
    %v180 = vmul.f32 %v168, %v176
    %v181 = vmul.f32 %v169, %v176
    %v182 = vmul.f32 %v170, %v176
    %v183 = vmul.f32 %v171, %v176
    %v185 = vlaneseq
    %v186 = vshrl.u32 %v185, 7
    %v187 = vsub.s32 0, %v186
    %v188 = vrot.slane %v91, %v187
    %v190 = vadd.f32 %v178, %v188
    %v191 = vadd.f32 %v179, %v188
    %v192 = vadd.f32 %v180, %v188
    %v193 = vadd.f32 %v181, %v188
    %v194 = vadd.f32 %v182, %v188
    %v195 = vadd.f32 %v183, %v188
    %v196 = vpack.c.bf16 %v191, %v190
    %v197 = vpack.c.bf16 %v193, %v192
    %v198 = vpack.c.bf16 %v195, %v194
    %v199 = vld [vmem:[#allocation8] sm:$0xf]
    %v200 = vld [vmem:[#allocation8 + $0x4] sm:$0xf]
    %v201 = vld [vmem:[#allocation8 + $0x8] sm:$0xf]
    %v202 = vld [vmem:[#allocation8 + $0xc] sm:$0xf]
    %v203 = vld [vmem:[#allocation10] sm:$0x1]
    %v205 = vlaneseq
    %v206 = vshrl.u32 %v205, 7
    %v207 = vsub.s32 0, %v206
    %v208 = vrot.slane %v203, %v207
    %v214 = vunpack.c.l.b16 %v199
    %v215 = vunpack.c.l.b16 %v200
    %v216 = vunpack.c.l.b16 %v201
    %v217 = vunpack.c.l.b16 %v202
    %v218 = vpack.c.b16 %v215, %v214
    %v219 = vpack.c.b16 %v217, %v216
    %v223 = vsel %vm92, %v196, 0
    %v226 = vsel %vm92, %v197, 0
    %v229 = vsel %vm92, %v198, 0
    %231 = vmatprep.subr.bf16.mxu0 0
    %232 = vmatpush1.bf16.msra.mxu0 %v218
    %233 = vmatprep.subr.bf16.mxu0 0
    %234 = vmatpush1.bf16.msra.mxu0 %v219
    %235 = vmatprep.subr.bf16.mxu0 0
    %236 = vmatpush1.bf16.msra.mxu0 0
    %237 = vmatprep.subr.bf16.mxu0 0
    %238 = vmatpush1.bf16.msra.mxu0 0
    %239 = vmatprep.subr.bf16.mxu0 0
    %240 = vmatpush1.bf16.msra.mxu0 0
    %241 = vmatprep.subr.bf16.mxu0 0
    %242 = vmatpush1.bf16.msra.mxu0 0
    %243 = vmatprep.subr.bf16.mxu0 0
    %244 = vmatpush1.bf16.msra.mxu0 0
    %245 = vmatprep.subr.bf16.mxu0 0
    %246 = vmatpush1.bf16.msra.mxu0 0
    %247 = vmatprep.subr.bf16.mxu0 0
    %248 = vmatpush1.bf16.msra.mxu0 0
    %249 = vmatprep.subr.bf16.mxu0 0
    %250 = vmatpush1.bf16.msra.mxu0 0
    %251 = vmatprep.subr.bf16.mxu0 0
    %252 = vmatpush1.bf16.msra.mxu0 0
    %253 = vmatprep.subr.bf16.mxu0 0
    %254 = vmatpush1.bf16.msra.mxu0 0
    %255 = vmatprep.subr.bf16.mxu0 0
    %256 = vmatpush1.bf16.msra.mxu0 0
    %257 = vmatprep.subr.bf16.mxu0 0
    %258 = vmatpush1.bf16.msra.mxu0 0
    %259 = vmatprep.subr.bf16.mxu0 0
    %260 = vmatpush1.bf16.msra.mxu0 0
    %261 = vmatprep.subr.bf16.mxu0 0
    %262 = vmatpush1.bf16.msra.mxu0 0
    %263 = vmatprep.mubr.bf16.mxu0 0
    %264 = vmatmul.mubr.bf16.gmra.mrb[0].mxu0 %v223
    %v265 = vpop.f32.mrb[0].mxu0
    %v266 = vadd.f32 %v208, %v265
    %v267 = vpop.f32.mrb[0].mxu0
    %v268 = vpop.f32.mrb[0].mxu0
    %v269 = vadd.f32 %v208, %v268
    %v270 = vpop.f32.mrb[0].mxu0
    %271 = vmatprep.mubr.bf16.mxu0 0
    %272 = vmatmul.mubr.bf16.gmra.mrb[0].mxu0 %v226
    %v273 = vpop.f32.mrb[0].mxu0
    %v274 = vadd.f32 %v208, %v273
    %v275 = vpop.f32.mrb[0].mxu0
    %v276 = vpop.f32.mrb[0].mxu0
    %v277 = vadd.f32 %v208, %v276
    %v278 = vpop.f32.mrb[0].mxu0
    %279 = vmatprep.mubr.bf16.mxu0 0
    %280 = vmatmul.mubr.bf16.gmra.mrb[0].mxu0 %v229
    %v281 = vpop.f32.mrb[0].mxu0
    %v282 = vadd.f32 %v208, %v281
    %v283 = vpop.f32.mrb[0].mxu0
    %v284 = vpop.f32.mrb[0].mxu0
    %v285 = vadd.f32 %v208, %v284
    %v286 = vpop.f32.mrb[0].mxu0
    %287 = vdwg.mxu0
    %v288 = vpack.c.bf16 %v269, %v266
    %v289 = vpack.c.bf16 %v277, %v274
    %v290 = vpack.c.bf16 %v285, %v282
    %v294 = vunpack.c.l.b16 %v288
    %v295 = vunpack.c.h.b16 %v288
    %v296 = vunpack.c.l.b16 %v289
    %v297 = vunpack.c.h.b16 %v289
    %v298 = vunpack.c.l.b16 %v290
    %v299 = vunpack.c.h.b16 %v290
    %v300 = vpack.c.b16 %v294, %v294
    %v301 = vpack.c.b16 %v295, %v295
    %v302 = vpack.c.b16 %v296, %v296
    %v303 = vpack.c.b16 %v297, %v297
    %v304 = vpack.c.b16 %v298, %v298
    %v305 = vpack.c.b16 %v299, %v299
    %vm312 = vcmask 781312
    %313 = vst.msk [vmem:[#allocation11] sm:$0xf] %vm312, %v300
    %314 = vst.msk [vmem:[#allocation11 + $0x4] sm:$0xf] %vm312, %v301
    %315 = vst.msk [vmem:[#allocation11 + $0x8] sm:$0xf] %vm312, %v302
    %316 = vst.msk [vmem:[#allocation11 + $0xc] sm:$0xf] %vm312, %v303
    %317 = vst.msk [vmem:[#allocation11 + $0x10] sm:$0xf] %vm312, %v304
    %318 = vst.msk [vmem:[#allocation11 + $0x14] sm:$0xf] %vm312, %v305
    // Predicated region
    $region42: #{ast_forward.10} parent=1 // pred_check
      _
    $region43: #{ast_forward.10} parent=1 // pred_check_branch
      %320 = sbr.rel (0) target = $region45
    $region44: #{ast_forward.10} parent=1 // pred_region
      %s322 = ssub.s32 384, 384
      %323 = vsyncadd [#allocation4], %s322
      %s324 = sshll.u32 [#allocation11], 4
      %s325 = int_to_ptr.vmem [resolvable:$true] %s324
      %330 = dma.vmem_to_hbm [thread:$0]  %s325, 384, %s5, [#allocation4], 64, 64, 4
    $region45: #{ast_forward.10} parent=1 // pred_fallthru
      _
    // Predicated region
    $region46: #{ast_forward.10} parent=1 // pred_check
      _
    $region47: #{ast_forward.10} parent=1 // pred_check_branch
      %332 = sbr.rel (0) target = $region49
    $region48: #{ast_forward.10} parent=1 // pred_region
      %333 = dma.done [#allocation4], 384
    $region49: #{ast_forward.10} parent=1 // pred_fallthru
      _
    %334 = vsyncpa [#allocation3], 1
    %335 = vsyncpa [#allocation6], 1
    %336 = vsyncpa [#allocation9], 1
    %337 = vsyncpa [#allocation4], 1

// kernel: ast_forward.13
$region0: #{ast_forward.13}
  #allocation0 [shape = 'u32[]', space=smem, size = 0x4, offset = 0x4, fixed_abs, tag = 'smem constant byte address 0x4 - core index']
  #allocation1 [shape = 'u32[144,128]{1,0:T(1,128)}', space=vmem, size = 0x12000, scoped, tag = 'internal scratch']
  %s0 = inlined_call_operand.hbm [shape: bf16[48,64], index: 0, kind: input, shape index: {}]
  %s1 = inlined_call_operand.hbm [shape: bf16[64,32], index: 1, kind: input, shape index: {}]
  %s2 = inlined_call_operand.hbm [shape: f32[1,32], index: 2, kind: input, shape index: {}]
  %s3 = inlined_call_operand.hbm [shape: f32[48,32], index: 3, kind: input, shape index: {}]
  %s4 = inlined_call_operand.hbm [shape: f32[48,32], index: 4, kind: output, shape index: {}]
  %s5 = sld [smem:[#allocation0]]
  $region42: #{ast_forward.13} parent=0
    _
  %s7 = ssub.s32 1, %s5
  %s8 = scalar_select 0, %s7, %s5
  $region1: #{ast_forward.13} parent=0
    #allocation2 [shape = 'u8[12288]{0}', space=vmem, size = 0x3000, scoped, tag = 'input window, operand 0, single buffered']
    #allocation3 [shape = 's32[1]{0}', space=sflag, size = 0x4, scoped, tag = 'scoped memory for ast_forward.13']
    #allocation4 [shape = 's32[1]{0}', space=sflag, size = 0x4, scoped, tag = 'scoped memory for ast_forward.13']
    #allocation5 [shape = 'u8[16384]{0}', space=vmem, size = 0x4000, scoped, tag = 'input window, operand 1, single buffered']
    #allocation6 [shape = 's32[1]{0}', space=sflag, size = 0x4, scoped, tag = 'scoped memory for ast_forward.13']
    #allocation7 [shape = 'u8[512]{0}', space=vmem, size = 0x400, scoped, tag = 'input window, operand 2, single buffered']
    #allocation8 [shape = 'u8[24576]{0}', space=vmem, size = 0x6000, scoped, tag = 'input window, operand 3, single buffered']
    #allocation9 [shape = 's32[1]{0}', space=sflag, size = 0x4, scoped, tag = 'scoped memory for ast_forward.13']
    #allocation10 [shape = 'u8[24576]{0}', space=vmem, size = 0x6000, scoped, tag = 'output window, operand 0, single buffered']
    %9 = vsyncpa [#allocation3], 0
    %10 = vsyncpa [#allocation6], 0
    %11 = vsyncpa [#allocation9], 0
    %12 = vsyncpa [#allocation4], 0
    // Predicated region
    $region2: #{ast_forward.13} parent=1 // pred_check
      _
    $region3: #{ast_forward.13} parent=1 // pred_check_branch
      %14 = sbr.rel (0) target = $region5
    $region4: #{ast_forward.13} parent=1 // pred_region
      %s16 = ssub.s32 384, 384
      %17 = vsyncadd [#allocation3], %s16
      %s18 = sshll.u32 [#allocation2], 4
      %s19 = int_to_ptr.vmem [resolvable:$true] %s18
      %24 = dma.hbm_to_vmem [thread:$0]  %s0, 384, %s19, [#allocation3], 64, 64, 4
    $region5: #{ast_forward.13} parent=1 // pred_fallthru
      _
    // Predicated region
    $region6: #{ast_forward.13} parent=1 // pred_check
      _
    $region7: #{ast_forward.13} parent=1 // pred_check_branch
      %26 = sbr.rel (0) target = $region9
    $region8: #{ast_forward.13} parent=1 // pred_region
      %s28 = ssub.s32 512, 512
      %29 = vsyncadd [#allocation6], %s28
      %s30 = sshll.u32 [#allocation5], 4
      %s31 = int_to_ptr.vmem [resolvable:$true] %s30
      %36 = dma.hbm_to_vmem [thread:$0]  %s1, 512, %s31, [#allocation6], 64, 64, 4
    $region9: #{ast_forward.13} parent=1 // pred_fallthru
      _
    // Predicated region
    $region10: #{ast_forward.13} parent=1 // pred_check
      _
    $region11: #{ast_forward.13} parent=1 // pred_check_branch
      %38 = sbr.rel (0) target = $region13
    $region12: #{ast_forward.13} parent=1 // pred_region
      %s40 = ssub.s32 16, 16
      %41 = vsyncadd [#allocation6], %s40
      %s43 = sshll.u32 [#allocation7], 4
      %s44 = int_to_ptr.vmem [resolvable:$true] %s43
      %46 = dma.hbm_to_vmem [thread:$0]  %s2, 16, %s44, [#allocation6]
    $region13: #{ast_forward.13} parent=1 // pred_fallthru
      _
    // Predicated region
    $region14: #{ast_forward.13} parent=1 // pred_check
      _
    $region15: #{ast_forward.13} parent=1 // pred_check_branch
      %48 = sbr.rel (0) target = $region17
    $region16: #{ast_forward.13} parent=1 // pred_region
      %s50 = ssub.s32 768, 768
      %51 = vsyncadd [#allocation9], %s50
      %s52 = sshll.u32 [#allocation8], 4
      %s53 = int_to_ptr.vmem [resolvable:$true] %s52
      %58 = dma.hbm_to_vmem [thread:$0]  %s3, 768, %s53, [#allocation9], 128, 128, 8
    $region17: #{ast_forward.13} parent=1 // pred_fallthru
      _
    // Predicated region
    $region18: #{ast_forward.13} parent=1 // pred_check
      _
    $region19: #{ast_forward.13} parent=1 // pred_check_branch
      %60 = sbr.rel (0) target = $region21
    $region20: #{ast_forward.13} parent=1 // pred_region
      %61 = dma.done [#allocation3], 384
    $region21: #{ast_forward.13} parent=1 // pred_fallthru
      _
    // Predicated region
    $region22: #{ast_forward.13} parent=1 // pred_check
      _
    $region23: #{ast_forward.13} parent=1 // pred_check_branch
      %63 = sbr.rel (0) target = $region25
    $region24: #{ast_forward.13} parent=1 // pred_region
      %64 = dma.done [#allocation6], 512
    $region25: #{ast_forward.13} parent=1 // pred_fallthru
      _
    // Predicated region
    $region26: #{ast_forward.13} parent=1 // pred_check
      _
    $region27: #{ast_forward.13} parent=1 // pred_check_branch
      %66 = sbr.rel (0) target = $region29
    $region28: #{ast_forward.13} parent=1 // pred_region
      %67 = dma.done [#allocation6], 16
    $region29: #{ast_forward.13} parent=1 // pred_fallthru
      _
    // Predicated region
    $region30: #{ast_forward.13} parent=1 // pred_check
      _
    $region31: #{ast_forward.13} parent=1 // pred_check_branch
      %69 = sbr.rel (0) target = $region33
    $region32: #{ast_forward.13} parent=1 // pred_region
      %70 = dma.done [#allocation9], 768
    $region33: #{ast_forward.13} parent=1 // pred_fallthru
      _
    %v72 = vld [vmem:[#allocation2] sm:$0xf]
    %v73 = vld [vmem:[#allocation2 + $0x4] sm:$0xf]
    %v74 = vld [vmem:[#allocation2 + $0x8] sm:$0xf]
    %v75 = vld [vmem:[#allocation2 + $0xc] sm:$0xf]
    %v76 = vld [vmem:[#allocation2 + $0x10] sm:$0xf]
    %v77 = vld [vmem:[#allocation2 + $0x14] sm:$0xf]
    %v78 = vld [vmem:[#allocation5] sm:$0xf]
    %v79 = vld [vmem:[#allocation5 + $0x4] sm:$0xf]
    %v80 = vld [vmem:[#allocation5 + $0x8] sm:$0xf]
    %v81 = vld [vmem:[#allocation5 + $0xc] sm:$0xf]
    %v82 = vld [vmem:[#allocation5 + $0x10] sm:$0xf]
    %v83 = vld [vmem:[#allocation5 + $0x14] sm:$0xf]
    %v84 = vld [vmem:[#allocation5 + $0x18] sm:$0xf]
    %v85 = vld [vmem:[#allocation5 + $0x1c] sm:$0xf]
    %v86 = vld [vmem:[#allocation7] sm:$0x1]
    %v88 = vlaneseq
    %v89 = vshrl.u32 %v88, 7
    %v90 = vsub.s32 0, %v89
    %v91 = vrot.slane %v86, %v90
    %v99 = vunpack.c.l.b16 %v72
    %v100 = vunpack.c.l.b16 %v73
    %v101 = vunpack.c.l.b16 %v74
    %v102 = vunpack.c.l.b16 %v75
    %v103 = vunpack.c.l.b16 %v76
    %v104 = vunpack.c.l.b16 %v77
    %v105 = vpack.c.b16 %v100, %v99
    %v106 = vpack.c.b16 %v102, %v101
    %v107 = vpack.c.b16 %v104, %v103
    %v116 = vunpack.c.l.b16 %v78
    %v117 = vunpack.c.l.b16 %v79
    %v118 = vunpack.c.l.b16 %v80
    %v119 = vunpack.c.l.b16 %v81
    %v120 = vunpack.c.l.b16 %v82
    %v121 = vunpack.c.l.b16 %v83
    %v122 = vunpack.c.l.b16 %v84
    %v123 = vunpack.c.l.b16 %v85
    %v124 = vpack.c.b16 %v117, %v116
    %v125 = vpack.c.b16 %v119, %v118
    %v126 = vpack.c.b16 %v121, %v120
    %v127 = vpack.c.b16 %v123, %v122
    %vm132 = vcmask 523264
    %v134 = vsel %vm132, %v105, 0
    %v137 = vsel %vm132, %v106, 0
    %v140 = vsel %vm132, %v107, 0
    %142 = vmatprep.subr.bf16.mxu0 0
    %143 = vmatpush1.bf16.msra.mxu0 %v124
    %144 = vmatprep.subr.bf16.mxu0 0
    %145 = vmatpush1.bf16.msra.mxu0 %v125
    %146 = vmatprep.subr.bf16.mxu0 0
    %147 = vmatpush1.bf16.msra.mxu0 %v126
    %148 = vmatprep.subr.bf16.mxu0 0
    %149 = vmatpush1.bf16.msra.mxu0 %v127
    %150 = vmatprep.subr.bf16.mxu0 0
    %151 = vmatpush1.bf16.msra.mxu0 0
    %152 = vmatprep.subr.bf16.mxu0 0
    %153 = vmatpush1.bf16.msra.mxu0 0
    %154 = vmatprep.subr.bf16.mxu0 0
    %155 = vmatpush1.bf16.msra.mxu0 0
    %156 = vmatprep.subr.bf16.mxu0 0
    %157 = vmatpush1.bf16.msra.mxu0 0
    %158 = vmatprep.subr.bf16.mxu0 0
    %159 = vmatpush1.bf16.msra.mxu0 0
    %160 = vmatprep.subr.bf16.mxu0 0
    %161 = vmatpush1.bf16.msra.mxu0 0
    %162 = vmatprep.subr.bf16.mxu0 0
    %163 = vmatpush1.bf16.msra.mxu0 0
    %164 = vmatprep.subr.bf16.mxu0 0
    %165 = vmatpush1.bf16.msra.mxu0 0
    %166 = vmatprep.subr.bf16.mxu0 0
    %167 = vmatpush1.bf16.msra.mxu0 0
    %168 = vmatprep.subr.bf16.mxu0 0
    %169 = vmatpush1.bf16.msra.mxu0 0
    %170 = vmatprep.subr.bf16.mxu0 0
    %171 = vmatpush1.bf16.msra.mxu0 0
    %172 = vmatprep.subr.bf16.mxu0 0
    %173 = vmatpush1.bf16.msra.mxu0 0
    %174 = vmatprep.mubr.bf16.mxu0 0
    %175 = vmatmul.mubr.bf16.gmra.mrb[0].mxu0 %v134
    %v176 = vpop.f32.mrb[0].mxu0
    %v177 = vadd.f32 %v91, %v176
    %v178 = vpop.f32.mrb[0].mxu0
    %v179 = vpop.f32.mrb[0].mxu0
    %v180 = vadd.f32 %v91, %v179
    %v181 = vpop.f32.mrb[0].mxu0
    %182 = vmatprep.mubr.bf16.mxu0 0
    %183 = vmatmul.mubr.bf16.gmra.mrb[0].mxu0 %v137
    %v184 = vpop.f32.mrb[0].mxu0
    %v185 = vadd.f32 %v91, %v184
    %v186 = vpop.f32.mrb[0].mxu0
    %v187 = vpop.f32.mrb[0].mxu0
    %v188 = vadd.f32 %v91, %v187
    %v189 = vpop.f32.mrb[0].mxu0
    %190 = vmatprep.mubr.bf16.mxu0 0
    %191 = vmatmul.mubr.bf16.gmra.mrb[0].mxu0 %v140
    %v192 = vpop.f32.mrb[0].mxu0
    %v193 = vadd.f32 %v91, %v192
    %v194 = vpop.f32.mrb[0].mxu0
    %v195 = vpop.f32.mrb[0].mxu0
    %v196 = vadd.f32 %v91, %v195
    %v197 = vpop.f32.mrb[0].mxu0
    %198 = vdwg.mxu0
    %v199 = vld [vmem:[#allocation8] sm:$0xff]
    %v200 = vld [vmem:[#allocation8 + $0x8] sm:$0xff]
    %v201 = vld [vmem:[#allocation8 + $0x10] sm:$0xff]
    %v202 = vld [vmem:[#allocation8 + $0x18] sm:$0xff]
    %v203 = vld [vmem:[#allocation8 + $0x20] sm:$0xff]
    %v204 = vld [vmem:[#allocation8 + $0x28] sm:$0xff]
    %v205 = vadd.f32 %v177, %v199
    %v206 = vadd.f32 %v180, %v200
    %v207 = vadd.f32 %v185, %v201
    %v208 = vadd.f32 %v188, %v202
    %v209 = vadd.f32 %v193, %v203
    %v210 = vadd.f32 %v196, %v204
    %vm211 = vcmask 261120
    %212 = vst.msk [vmem:[#allocation10] sm:$0xff] %vm211, %v205
    %213 = vst.msk [vmem:[#allocation10 + $0x8] sm:$0xff] %vm211, %v206
    %214 = vst.msk [vmem:[#allocation10 + $0x10] sm:$0xff] %vm211, %v207
    %215 = vst.msk [vmem:[#allocation10 + $0x18] sm:$0xff] %vm211, %v208
    %216 = vst.msk [vmem:[#allocation10 + $0x20] sm:$0xff] %vm211, %v209
    %217 = vst.msk [vmem:[#allocation10 + $0x28] sm:$0xff] %vm211, %v210
    // Predicated region
    $region34: #{ast_forward.13} parent=1 // pred_check
      _
    $region35: #{ast_forward.13} parent=1 // pred_check_branch
      %219 = sbr.rel (0) target = $region37
    $region36: #{ast_forward.13} parent=1 // pred_region
      %s221 = ssub.s32 768, 768
      %222 = vsyncadd [#allocation4], %s221
      %s223 = sshll.u32 [#allocation10], 4
      %s224 = int_to_ptr.vmem [resolvable:$true] %s223
      %229 = dma.vmem_to_hbm [thread:$0]  %s224, 768, %s4, [#allocation4], 128, 128, 8
    $region37: #{ast_forward.13} parent=1 // pred_fallthru
      _
    // Predicated region
    $region38: #{ast_forward.13} parent=1 // pred_check
      _
    $region39: #{ast_forward.13} parent=1 // pred_check_branch
      %231 = sbr.rel (0) target = $region41
    $region40: #{ast_forward.13} parent=1 // pred_region
      %232 = dma.done [#allocation4], 768
    $region41: #{ast_forward.13} parent=1 // pred_fallthru
      _
    %233 = vsyncpa [#allocation3], 1
    %234 = vsyncpa [#allocation6], 1
    %235 = vsyncpa [#allocation9], 1
    %236 = vsyncpa [#allocation4], 1

// kernel: ast_forward.11
$region0: #{ast_forward.11}
  #allocation0 [shape = 'u32[]', space=smem, size = 0x4, offset = 0x4, fixed_abs, tag = 'smem constant byte address 0x4 - core index']
  #allocation1 [shape = 'u32[144,128]{1,0:T(1,128)}', space=vmem, size = 0x12000, scoped, tag = 'internal scratch']
  %s0 = inlined_call_operand.hbm [shape: bf16[2,3,4,24,8], index: 0, kind: input, shape index: {}, may-alias: {0,1,2}]
  %s1 = inlined_call_operand.hbm [shape: bf16[2,3,4,24,8], index: 1, kind: input, shape index: {}, may-alias: {0,1,2}]
  %s2 = inlined_call_operand.hbm [shape: bf16[2,3,4,24,8], index: 2, kind: input, shape index: {}, may-alias: {0,1,2}]
  %s3 = inlined_call_operand.hbm [shape: bf16[4,8,32], index: 3, kind: input, shape index: {}]
  %s4 = inlined_call_operand.hbm [shape: f32[1,32], index: 4, kind: input, shape index: {}]
  %s5 = inlined_call_operand.hbm [shape: f32[2,24,32], index: 5, kind: input, shape index: {}]
  %s6 = inlined_call_operand.hbm [shape: f32[2,24,32], index: 6, kind: output, shape index: {}]
  %s7 = sld [smem:[#allocation0]]
  $region85: #{ast_forward.11} parent=0
    _
  %s9 = ssub.s32 1, %s7
  %s10 = scalar_select 0, %s9, %s7
  $region1: #{ast_forward.11} parent=0
    #allocation2 [shape = 'u8[12288]{0}', space=vmem, size = 0x3000, scoped, tag = 'input window, operand 0']
    #allocation3 [shape = 's32[2]{0}', space=sflag, size = 0x8, scoped, tag = 'scoped memory for ast_forward.11']
    #allocation4 [shape = 's32[2]{0}', space=sflag, size = 0x8, scoped, tag = 'scoped memory for ast_forward.11']
    #allocation5 [shape = 'u8[12288]{0}', space=vmem, size = 0x3000, scoped, tag = 'input window, operand 1']
    #allocation6 [shape = 's32[2]{0}', space=sflag, size = 0x8, scoped, tag = 'scoped memory for ast_forward.11']
    #allocation7 [shape = 'u8[12288]{0}', space=vmem, size = 0x3000, scoped, tag = 'input window, operand 2']
    #allocation8 [shape = 'u8[4096]{0}', space=vmem, size = 0x1000, scoped, tag = 'input window, operand 3']
    #allocation9 [shape = 's32[2]{0}', space=sflag, size = 0x8, scoped, tag = 'scoped memory for ast_forward.11']
    #allocation10 [shape = 'u8[512]{0}', space=vmem, size = 0x400, scoped, tag = 'input window, operand 4, single buffered']
    #allocation11 [shape = 'u8[24576]{0}', space=vmem, size = 0x6000, scoped, tag = 'input window, operand 5']
    #allocation12 [shape = 's32[2]{0}', space=sflag, size = 0x8, scoped, tag = 'scoped memory for ast_forward.11']
    #allocation13 [shape = 'u8[24576]{0}', space=vmem, size = 0x6000, scoped, tag = 'output window, operand 0']
    %11 = vsyncpa [#allocation3], 0
    %s12 = scalar_lea.sflag [#allocation3], 1
    %13 = vsyncpa %s12, 0
    %14 = vsyncpa [#allocation6], 0
    %s15 = scalar_lea.sflag [#allocation6], 1
    %16 = vsyncpa %s15, 0
    %17 = vsyncpa [#allocation9], 0
    %s18 = scalar_lea.sflag [#allocation9], 1
    %19 = vsyncpa %s18, 0
    %20 = vsyncpa [#allocation12], 0
    %s21 = scalar_lea.sflag [#allocation12], 1
    %22 = vsyncpa %s21, 0
    %23 = vsyncpa [#allocation4], 0
    %s24 = scalar_lea.sflag [#allocation4], 1
    %25 = vsyncpa %s24, 0
    loop: start=0, step=1, limit=10
    $region2: #{ast_forward.11} parent=1 // loop_pre_header
      _
    $region3: #{ast_forward.11} parent=1 // loop_header
      %s27 = sphi 0, %s31
      %p28 = scmp.ge.s32.totalorder %s27, 10
      %s34 = sphi 0, %s53
      %s35 = sphi 0, %s49
      %s36 = sphi 0, %s45
      %s37 = sphi 0, %s34
      %s38 = sphi 0, %s35
      %s39 = sphi 0, %s36
      %s40 = sphi 0, %s37
      %s41 = sphi 0, %s38
      %s42 = sphi 0, %s39
      %s60 = sphi 0, %s62
      %s63 = sphi 0, %s60
      %s64 = sphi 0, %s63
      %s80 = sphi 0, %s64
      %s88 = sphi 0, %s90
      %s91 = sphi 0, %s88
      %s92 = sphi 0, %s91
      %s108 = sphi 0, %s92
      %s116 = sphi 0, %s118
      %s119 = sphi 0, %s116
      %s120 = sphi 0, %s119
      %s136 = sphi 0, %s120
      %s142 = sphi 0, %s144
      %s145 = sphi 0, %s142
      %s146 = sphi 0, %s145
      %s162 = sphi 0, %s146
      %s166 = sphi 0, %s166
      %s168 = sphi 0, %s166
      %s169 = sphi 0, %s168
      %s183 = sphi 0, %s169
      %s191 = sphi 0, %s193
      %s194 = sphi 0, %s191
      %s195 = sphi 0, %s194
      %s211 = sphi 0, %s195
      %s219 = sphi 0, %s221
      %s222 = sphi 0, %s219
      %s223 = sphi 0, %s222
      %s239 = sphi 0, %s223
    $region4: #{ast_forward.11} parent=1 // loop_header_branch
      %30 = sbr.rel (%p28) target = $region8
    $region5: #{ast_forward.11} parent=1 // loop_body
      %s32 = ssub.s32 %s27, 1
      %s33 = ssub.s32 %s27, 2
      %s43 = sadd.s32 1, %s36
      %p44 = scmp.ge.s32.totalorder %s43, 4
      %s45 = scalar_select %p44, 0, %s43
      %s46 = sadd.s32 1, %s35
      %s47 = scalar_select %p44, %s46, %s35
      %p48 = scmp.ge.s32.totalorder %s47, 1
      %s49 = scalar_select %p48, 0, %s47
      %s50 = sadd.s32 1, %s34
      %s51 = scalar_select %p48, %s50, %s34
      %p52 = scmp.ge.s32.totalorder %s51, 2
      %s53 = scalar_select %p52, 0, %s51
      %s54 = ssub.s32 %s34, %s53
      %s55 = ssub.s32 %s36, %s45
      %s56 = sor.u32 %s54, %s55
      %s57 = ssub.s32 %s35, %s49
      %s58 = sor.u32 %s56, %s57
      %p59 = scmp.eq.s32.totalorder %s58, 0
      %s61 = sadd.s32 %s60, 1
      %s62 = scalar_select %p59, %s60, %s61
      %p65 = pneg %p59
      %p66 = scmp.eq.s32.totalorder %s27, 7
      %p67 = por %p65, %p66
      %p68 = scmp.ne.s32.totalorder %s60, %s63
      %p69 = scmp.eq.s32.totalorder %s27, 0
      %p70 = por %p68, %p69
      %p71 = scmp.ne.s32.totalorder %s60, %s63
      %p72 = scmp.eq.s32.totalorder %s32, 7
      %p73 = por %p71, %p72
      %p74 = scmp.ne.s32.totalorder %s63, %s64
      %p75 = scmp.eq.s32.totalorder %s32, 0
      %p76 = por %p74, %p75
      %p77 = scmp.ne.s32.totalorder %s63, %s64
      %p78 = scmp.eq.s32.totalorder %s33, 7
      %p79 = por %p77, %p78
      %p81 = scmp.ne.s32.totalorder %s64, %s80
      %p82 = scmp.eq.s32.totalorder %s33, 0
      %p83 = por %p81, %p82
      %s84 = ssub.s32 %s34, %s53
      %s85 = ssub.s32 %s36, %s45
      %s86 = sor.u32 %s84, %s85
      %p87 = scmp.eq.s32.totalorder %s86, 0
      %s89 = sadd.s32 %s88, 1
      %s90 = scalar_select %p87, %s88, %s89
      %p93 = pneg %p87
      %p94 = scmp.eq.s32.totalorder %s27, 7
      %p95 = por %p93, %p94
      %p96 = scmp.ne.s32.totalorder %s88, %s91
      %p97 = scmp.eq.s32.totalorder %s27, 0
      %p98 = por %p96, %p97
      %p99 = scmp.ne.s32.totalorder %s88, %s91
      %p100 = scmp.eq.s32.totalorder %s32, 7
      %p101 = por %p99, %p100
      %p102 = scmp.ne.s32.totalorder %s91, %s92
      %p103 = scmp.eq.s32.totalorder %s32, 0
      %p104 = por %p102, %p103
      %p105 = scmp.ne.s32.totalorder %s91, %s92
      %p106 = scmp.eq.s32.totalorder %s33, 7
      %p107 = por %p105, %p106
      %p109 = scmp.ne.s32.totalorder %s92, %s108
      %p110 = scmp.eq.s32.totalorder %s33, 0
      %p111 = por %p109, %p110
      %s112 = ssub.s32 %s34, %s53
      %s113 = ssub.s32 %s36, %s45
      %s114 = sor.u32 %s112, %s113
      %p115 = scmp.eq.s32.totalorder %s114, 0
      %s117 = sadd.s32 %s116, 1
      %s118 = scalar_select %p115, %s116, %s117
      %p121 = pneg %p115
      %p122 = scmp.eq.s32.totalorder %s27, 7
      %p123 = por %p121, %p122
      %p124 = scmp.ne.s32.totalorder %s116, %s119
      %p125 = scmp.eq.s32.totalorder %s27, 0
      %p126 = por %p124, %p125
      %p127 = scmp.ne.s32.totalorder %s116, %s119
      %p128 = scmp.eq.s32.totalorder %s32, 7
      %p129 = por %p127, %p128
      %p130 = scmp.ne.s32.totalorder %s119, %s120
      %p131 = scmp.eq.s32.totalorder %s32, 0
      %p132 = por %p130, %p131
      %p133 = scmp.ne.s32.totalorder %s119, %s120
      %p134 = scmp.eq.s32.totalorder %s33, 7
      %p135 = por %p133, %p134
      %p137 = scmp.ne.s32.totalorder %s120, %s136
      %p138 = scmp.eq.s32.totalorder %s33, 0
      %p139 = por %p137, %p138
      %s140 = ssub.s32 %s36, %s45
      %p141 = scmp.eq.s32.totalorder %s140, 0
      %s143 = sadd.s32 %s142, 1
      %s144 = scalar_select %p141, %s142, %s143
      %p147 = pneg %p141
      %p148 = scmp.eq.s32.totalorder %s27, 7
      %p149 = por %p147, %p148
      %p150 = scmp.ne.s32.totalorder %s142, %s145
      %p151 = scmp.eq.s32.totalorder %s27, 0
      %p152 = por %p150, %p151
      %p153 = scmp.ne.s32.totalorder %s142, %s145
      %p154 = scmp.eq.s32.totalorder %s32, 7
      %p155 = por %p153, %p154
      %p156 = scmp.ne.s32.totalorder %s145, %s146
      %p157 = scmp.eq.s32.totalorder %s32, 0
      %p158 = por %p156, %p157
      %p159 = scmp.ne.s32.totalorder %s145, %s146
      %p160 = scmp.eq.s32.totalorder %s33, 7
      %p161 = por %p159, %p160
      %p163 = scmp.ne.s32.totalorder %s146, %s162
      %p164 = scmp.eq.s32.totalorder %s33, 0
      %p165 = por %p163, %p164
      %s167 = sadd.s32 %s166, 1
      %p170 = scmp.eq.s32.totalorder %s27, 7
      %p171 = scmp.ne.s32.totalorder %s166, %s168
      %p172 = scmp.eq.s32.totalorder %s27, 0
      %p173 = por %p171, %p172
      %p174 = scmp.ne.s32.totalorder %s166, %s168
      %p175 = scmp.eq.s32.totalorder %s32, 7
      %p176 = por %p174, %p175
      %p177 = scmp.ne.s32.totalorder %s168, %s169
      %p178 = scmp.eq.s32.totalorder %s32, 0
      %p179 = por %p177, %p178
      %p180 = scmp.ne.s32.totalorder %s168, %s169
      %p181 = scmp.eq.s32.totalorder %s33, 7
      %p182 = por %p180, %p181
      %p184 = scmp.ne.s32.totalorder %s169, %s183
      %p185 = scmp.eq.s32.totalorder %s33, 0
      %p186 = por %p184, %p185
      %s187 = ssub.s32 %s34, %s53
      %s188 = ssub.s32 %s35, %s49
      %s189 = sor.u32 %s187, %s188
      %p190 = scmp.eq.s32.totalorder %s189, 0
      %s192 = sadd.s32 %s191, 1
      %s193 = scalar_select %p190, %s191, %s192
      %p196 = pneg %p190
      %p197 = scmp.eq.s32.totalorder %s27, 7
      %p198 = por %p196, %p197
      %p199 = scmp.ne.s32.totalorder %s191, %s194
      %p200 = scmp.eq.s32.totalorder %s27, 0
      %p201 = por %p199, %p200
      %p202 = scmp.ne.s32.totalorder %s191, %s194
      %p203 = scmp.eq.s32.totalorder %s32, 7
      %p204 = por %p202, %p203
      %p205 = scmp.ne.s32.totalorder %s194, %s195
      %p206 = scmp.eq.s32.totalorder %s32, 0
      %p207 = por %p205, %p206
      %p208 = scmp.ne.s32.totalorder %s194, %s195
      %p209 = scmp.eq.s32.totalorder %s33, 7
      %p210 = por %p208, %p209
      %p212 = scmp.ne.s32.totalorder %s195, %s211
      %p213 = scmp.eq.s32.totalorder %s33, 0
      %p214 = por %p212, %p213
      %s215 = ssub.s32 %s34, %s53
      %s216 = ssub.s32 %s35, %s49
      %s217 = sor.u32 %s215, %s216
      %p218 = scmp.eq.s32.totalorder %s217, 0
      %s220 = sadd.s32 %s219, 1
      %s221 = scalar_select %p218, %s219, %s220
      %p224 = pneg %p218
      %p225 = scmp.eq.s32.totalorder %s27, 7
      %p226 = por %p224, %p225
      %p227 = scmp.ne.s32.totalorder %s219, %s222
      %p228 = scmp.eq.s32.totalorder %s27, 0
      %p229 = por %p227, %p228
      %p230 = scmp.ne.s32.totalorder %s219, %s222
      %p231 = scmp.eq.s32.totalorder %s32, 7
      %p232 = por %p230, %p231
      %p233 = scmp.ne.s32.totalorder %s222, %s223
      %p234 = scmp.eq.s32.totalorder %s32, 0
      %p235 = por %p233, %p234
      %p236 = scmp.ne.s32.totalorder %s222, %s223
      %p237 = scmp.eq.s32.totalorder %s33, 7
      %p238 = por %p236, %p237
      %p240 = scmp.ne.s32.totalorder %s223, %s239
      %p241 = scmp.eq.s32.totalorder %s33, 0
      %p242 = por %p240, %p241
      %p243 = scmp.le.s32.totalorder 1, %s27
      %p244 = scmp.lt.s32.totalorder %s27, 9
      %p245 = pnand %p243, %p244
      %p246 = pneg %p245
      // Predicated region
      $region9: #{ast_forward.11} parent=5 // pred_check
        _
      $region10: #{ast_forward.11} parent=5 // pred_check_branch
        %248 = sbr.rel (%p245) target = $region12
      $region11: #{ast_forward.11} parent=5 // pred_region
        %s249 = ssub.s32 %s27, 1
        // Predicated region
        $region13: #{ast_forward.11} parent=11 // pred_check
          %p250 = pneg %p179
        $region14: #{ast_forward.11} parent=11 // pred_check_branch
          %252 = sbr.rel (%p250) target = $region16
        $region15: #{ast_forward.11} parent=11 // pred_region
          %s254 = ssub.s32 16, 16
          %255 = vsyncadd [#allocation9], %s254
          %s257 = sshll.u32 [#allocation10], 4
          %s258 = int_to_ptr.vmem [resolvable:$true] %s257
          %260 = dma.hbm_to_vmem [thread:$0]  %s4, 16, %s258, [#allocation9]
        $region16: #{ast_forward.11} parent=11 // pred_fallthru
          _
      $region12: #{ast_forward.11} parent=5 // pred_fallthru
        _
      %p261 = scmp.lt.s32.totalorder %s27, 8
      // Predicated region
      $region17: #{ast_forward.11} parent=5 // pred_check
        %p262 = pneg %p261
      $region18: #{ast_forward.11} parent=5 // pred_check_branch
        %264 = sbr.rel (%p262) target = $region20
      $region19: #{ast_forward.11} parent=5 // pred_region
        // Predicated region
        $region21: #{ast_forward.11} parent=19 // pred_check
          %p265 = pneg %p70
        $region22: #{ast_forward.11} parent=19 // pred_check_branch
          %267 = sbr.rel (%p265) target = $region24
        $region23: #{ast_forward.11} parent=19 // pred_region
          %s268 = sand.u32 %s60, 1
          %s269 = scalar_lea.sflag [#allocation3], %s268
          %s270 = sand.u32 %s60, 1
          %s271 = smul.addr %s270, 12
          %s272 = scalar_lea.vmem [#allocation2], %s271
          %s273 = smul.u32 3, %s35
          %s275 = ssub.s32 192, 192
          %276 = vsyncadd %s269, %s275
          %s277 = smul.addr %s36, 3
          %s278 = sadd.s32 %s273, %s277
          %s279 = smul.addr %s34, 36
          %s280 = sadd.s32 %s278, %s279
          %s281 = smul.addr %s280, 64
          %s282 = scalar_lea.hbm %s0, %s281
          %s283 = sshll.u32 %s272, 4
          %s284 = int_to_ptr.vmem [resolvable:$true] %s283
          %289 = dma.hbm_to_vmem [thread:$0]  %s282, 192, %s284, %s269, 64, 64, 4
        $region24: #{ast_forward.11} parent=19 // pred_fallthru
          _
        // Predicated region
        $region25: #{ast_forward.11} parent=19 // pred_check
          %p290 = pneg %p98
        $region26: #{ast_forward.11} parent=19 // pred_check_branch
          %292 = sbr.rel (%p290) target = $region28
        $region27: #{ast_forward.11} parent=19 // pred_region
          %s293 = sand.u32 %s27, 1
          %s294 = scalar_lea.sflag [#allocation6], %s293
          %s295 = sand.u32 %s88, 1
          %s296 = smul.addr %s295, 12
          %s297 = scalar_lea.vmem [#allocation5], %s296
          %s299 = ssub.s32 192, 192
          %300 = vsyncadd %s294, %s299
          %s301 = smul.addr %s36, 3
          %s302 = sadd.s32 %s301, 12
          %s303 = smul.addr %s34, 36
          %s304 = sadd.s32 %s302, %s303
          %s305 = smul.addr %s304, 64
          %s306 = scalar_lea.hbm %s1, %s305
          %s307 = sshll.u32 %s297, 4
          %s308 = int_to_ptr.vmem [resolvable:$true] %s307
          %313 = dma.hbm_to_vmem [thread:$0]  %s306, 192, %s308, %s294, 64, 64, 4
        $region28: #{ast_forward.11} parent=19 // pred_fallthru
          _
        // Predicated region
        $region29: #{ast_forward.11} parent=19 // pred_check
          %p314 = pneg %p126
        $region30: #{ast_forward.11} parent=19 // pred_check_branch
          %316 = sbr.rel (%p314) target = $region32
        $region31: #{ast_forward.11} parent=19 // pred_region
          %s317 = sand.u32 %s27, 1
          %s318 = scalar_lea.sflag [#allocation6], %s317
          %s319 = sand.u32 %s116, 1
          %s320 = smul.addr %s319, 12
          %s321 = scalar_lea.vmem [#allocation7], %s320
          %s323 = ssub.s32 192, 192
          %324 = vsyncadd %s318, %s323
          %s325 = smul.addr %s36, 3
          %s326 = sadd.s32 %s325, 24
          %s327 = smul.addr %s34, 36
          %s328 = sadd.s32 %s326, %s327
          %s329 = smul.addr %s328, 64
          %s330 = scalar_lea.hbm %s2, %s329
          %s331 = sshll.u32 %s321, 4
          %s332 = int_to_ptr.vmem [resolvable:$true] %s331
          %337 = dma.hbm_to_vmem [thread:$0]  %s330, 192, %s332, %s318, 64, 64, 4
        $region32: #{ast_forward.11} parent=19 // pred_fallthru
          _
        // Predicated region
        $region33: #{ast_forward.11} parent=19 // pred_check
          %p338 = pneg %p152
        $region34: #{ast_forward.11} parent=19 // pred_check_branch
          %340 = sbr.rel (%p338) target = $region36
        $region35: #{ast_forward.11} parent=19 // pred_region
          %s341 = sand.u32 %s27, 1
          %s342 = scalar_lea.sflag [#allocation9], %s341
          %s343 = sand.u32 %s142, 1
          %s344 = smul.addr %s343, 4
          %s345 = scalar_lea.vmem [#allocation8], %s344
          %s347 = ssub.s32 64, 64
          %348 = vsyncadd %s342, %s347
          %s349 = smul.addr %s36, 64
          %s350 = scalar_lea.hbm %s3, %s349
          %s352 = sshll.u32 %s345, 4
          %s353 = int_to_ptr.vmem [resolvable:$true] %s352
          %355 = dma.hbm_to_vmem [thread:$0]  %s350, 64, %s353, %s342
        $region36: #{ast_forward.11} parent=19 // pred_fallthru
          _
        // Predicated region
        $region37: #{ast_forward.11} parent=19 // pred_check
          %p356 = pneg %p201
        $region38: #{ast_forward.11} parent=19 // pred_check_branch
          %358 = sbr.rel (%p356) target = $region40
        $region39: #{ast_forward.11} parent=19 // pred_region
          %s359 = sand.u32 %s191, 1
          %s360 = scalar_lea.sflag [#allocation12], %s359
          %s361 = sand.u32 %s191, 1
          %s362 = smul.addr %s361, 24
          %s363 = scalar_lea.vmem [#allocation11], %s362
          %s364 = smul.u32 3, %s35
          %s366 = ssub.s32 384, 384
          %367 = vsyncadd %s360, %s366
          %s368 = smul.addr %s34, 3
          %s369 = sadd.s32 %s364, %s368
          %s370 = smul.addr %s369, 128
          %s371 = scalar_lea.hbm %s5, %s370
          %s372 = sshll.u32 %s363, 4
          %s373 = int_to_ptr.vmem [resolvable:$true] %s372
          %378 = dma.hbm_to_vmem [thread:$0]  %s371, 384, %s373, %s360, 128, 128, 8
        $region40: #{ast_forward.11} parent=19 // pred_fallthru
          _
      $region20: #{ast_forward.11} parent=5 // pred_fallthru
        _
      %p379 = scmp.le.s32.totalorder 1, %s27
      %p380 = scmp.lt.s32.totalorder %s27, 9
      %p381 = pnand %p379, %p380
      %p382 = pneg %p381
      // Predicated region
      $region41: #{ast_forward.11} parent=5 // pred_check
        _
      $region42: #{ast_forward.11} parent=5 // pred_check_branch
        %384 = sbr.rel (%p381) target = $region44
      $region43: #{ast_forward.11} parent=5 // pred_region
        %s385 = ssub.s32 %s27, 1
        %s386 = sand.u32 %s63, 1
        %s387 = scalar_lea.sflag [#allocation3], %s386
        %s388 = sand.u32 %s63, 1
        %s389 = smul.addr %s388, 12
        %s390 = scalar_lea.vmem [#allocation2], %s389
        // Predicated region
        $region45: #{ast_forward.11} parent=43 // pred_check
          %p391 = pneg %p76
        $region46: #{ast_forward.11} parent=43 // pred_check_branch
          %393 = sbr.rel (%p391) target = $region48
        $region47: #{ast_forward.11} parent=43 // pred_region
          %394 = dma.done %s387, 192
        $region48: #{ast_forward.11} parent=43 // pred_fallthru
          _
        %s395 = sand.u32 %s32, 1
        %s396 = scalar_lea.sflag [#allocation6], %s395
        %s397 = sand.u32 %s91, 1
        %s398 = smul.addr %s397, 12
        %s399 = scalar_lea.vmem [#allocation5], %s398
        // Predicated region
        $region49: #{ast_forward.11} parent=43 // pred_check
          %p400 = pneg %p104
        $region50: #{ast_forward.11} parent=43 // pred_check_branch
          %402 = sbr.rel (%p400) target = $region52
        $region51: #{ast_forward.11} parent=43 // pred_region
          %403 = dma.done %s396, 192
        $region52: #{ast_forward.11} parent=43 // pred_fallthru
          _
        %s404 = sand.u32 %s32, 1
        %s405 = scalar_lea.sflag [#allocation6], %s404
        %s406 = sand.u32 %s119, 1
        %s407 = smul.addr %s406, 12
        %s408 = scalar_lea.vmem [#allocation7], %s407
        // Predicated region
        $region53: #{ast_forward.11} parent=43 // pred_check
          %p409 = pneg %p132
        $region54: #{ast_forward.11} parent=43 // pred_check_branch
          %411 = sbr.rel (%p409) target = $region56
        $region55: #{ast_forward.11} parent=43 // pred_region
          %412 = dma.done %s405, 192
        $region56: #{ast_forward.11} parent=43 // pred_fallthru
          _
        %s413 = sand.u32 %s32, 1
        %s414 = scalar_lea.sflag [#allocation9], %s413
        %s415 = sand.u32 %s145, 1
        %s416 = smul.addr %s415, 4
        %s417 = scalar_lea.vmem [#allocation8], %s416
        // Predicated region
        $region57: #{ast_forward.11} parent=43 // pred_check
          %p418 = pneg %p158
        $region58: #{ast_forward.11} parent=43 // pred_check_branch
          %420 = sbr.rel (%p418) target = $region60
        $region59: #{ast_forward.11} parent=43 // pred_region
          %421 = dma.done %s414, 64
        $region60: #{ast_forward.11} parent=43 // pred_fallthru
          _
        // Predicated region
        $region61: #{ast_forward.11} parent=43 // pred_check
          %p422 = pneg %p179
        $region62: #{ast_forward.11} parent=43 // pred_check_branch
          %424 = sbr.rel (%p422) target = $region64
        $region63: #{ast_forward.11} parent=43 // pred_region
          %425 = dma.done [#allocation9], 16
        $region64: #{ast_forward.11} parent=43 // pred_fallthru
          _
        %s426 = sand.u32 %s194, 1
        %s427 = scalar_lea.sflag [#allocation12], %s426
        %s428 = sand.u32 %s194, 1
        %s429 = smul.addr %s428, 24
        %s430 = scalar_lea.vmem [#allocation11], %s429
        // Predicated region
        $region65: #{ast_forward.11} parent=43 // pred_check
          %p431 = pneg %p207
        $region66: #{ast_forward.11} parent=43 // pred_check_branch
          %433 = sbr.rel (%p431) target = $region68
        $region67: #{ast_forward.11} parent=43 // pred_region
          %434 = dma.done %s427, 384
        $region68: #{ast_forward.11} parent=43 // pred_fallthru
          _
        %s435 = sand.u32 %s63, 1
        %s436 = scalar_lea.sflag [#allocation3], %s435
        %s437 = sand.u32 %s63, 1
        %s438 = smul.addr %s437, 12
        %s439 = scalar_lea.vmem [#allocation2], %s438
        %p440 = pneg %p76
        %p441 = pneg %p73
        %s442 = sand.u32 %s32, 1
        %s443 = scalar_lea.sflag [#allocation6], %s442
        %s444 = sand.u32 %s91, 1
        %s445 = smul.addr %s444, 12
        %s446 = scalar_lea.vmem [#allocation5], %s445
        %p447 = pneg %p104
        %p448 = pneg %p101
        %s449 = sand.u32 %s32, 1
        %s450 = scalar_lea.sflag [#allocation6], %s449
        %s451 = sand.u32 %s119, 1
        %s452 = smul.addr %s451, 12
        %s453 = scalar_lea.vmem [#allocation7], %s452
        %p454 = pneg %p132
        %p455 = pneg %p129
        %s456 = sand.u32 %s32, 1
        %s457 = scalar_lea.sflag [#allocation9], %s456
        %s458 = sand.u32 %s145, 1
        %s459 = smul.addr %s458, 4
        %s460 = scalar_lea.vmem [#allocation8], %s459
        %p461 = pneg %p158
        %p462 = pneg %p155
        %p463 = pneg %p179
        %p464 = pneg %p176
        %s465 = sand.u32 %s194, 1
        %s466 = scalar_lea.sflag [#allocation12], %s465
        %s467 = sand.u32 %s194, 1
        %s468 = smul.addr %s467, 24
        %s469 = scalar_lea.vmem [#allocation11], %s468
        %p470 = pneg %p207
        %p471 = pneg %p204
        %p472 = pneg %p235
        %p473 = pneg %p232
        %s474 = sand.u32 %s222, 1
        %s475 = scalar_lea.sflag [#allocation4], %s474
        %s476 = sand.u32 %s222, 1
        %s477 = smul.addr %s476, 24
        %s478 = scalar_lea.vmem [#allocation13], %s477
        %s479 = smul.u32 3, %s38
        %s480 = smul.u32 3, %s38
        %s481 = smul.u32 3, %s38
        %p483 = scmp.eq.s32.totalorder %s39, 0
        // Predicated region
        $region69: #{ast_forward.11} parent=43 // pred_check
          %p484 = pneg %p483
        $region70: #{ast_forward.11} parent=43 // pred_check_branch
          %486 = sbr.rel (%p484) target = $region72
        $region71: #{ast_forward.11} parent=43 // pred_region
          %v487 = vld [vmem:[%s430] sm:$0xff]
          %v488 = vld [vmem:[%s430 + $0x8] sm:$0xff]
          %v489 = vld [vmem:[%s430 + $0x10] sm:$0xff]
          %v490 = vld [vmem:[#allocation10] sm:$0x1]
          %v492 = vlaneseq
          %v493 = vshrl.u32 %v492, 7
          %v494 = vsub.s32 0, %v493
          %v495 = vrot.slane %v490, %v494
          %v497 = vadd.f32 %v487, %v495
          %v498 = vadd.f32 %v488, %v495
          %v499 = vadd.f32 %v489, %v495
          %vm500 = vcmask 261120
          %501 = vst.msk [vmem:[%s478] sm:$0xff] %vm500, %v497
          %502 = vst.msk [vmem:[%s478 + $0x8] sm:$0xff] %vm500, %v498
          %503 = vst.msk [vmem:[%s478 + $0x10] sm:$0xff] %vm500, %v499
        $region72: #{ast_forward.11} parent=43 // pred_fallthru
          _
        %v504 = vld [vmem:[%s390] sm:$0xf]
        %v505 = vld [vmem:[%s390 + $0x4] sm:$0xf]
        %v506 = vld [vmem:[%s390 + $0x8] sm:$0xf]
        %v507 = vld [vmem:[%s399] sm:$0xf]
        %v508 = vld [vmem:[%s399 + $0x4] sm:$0xf]
        %v509 = vld [vmem:[%s399 + $0x8] sm:$0xf]
        %v510 = vld [vmem:[%s408] sm:$0xf]
        %v511 = vld [vmem:[%s408 + $0x4] sm:$0xf]
        %v512 = vld [vmem:[%s408 + $0x8] sm:$0xf]
        %v516 = vunpack.c.l.b16 %v504
        %v517 = vunpack.c.l.b16 %v505
        %v518 = vunpack.c.l.b16 %v506
        %v519 = vpack.c.b16 %v517, %v516
        %v520 = vpack.c.b16 %v518, %v518
        %v524 = vunpack.c.l.b16 %v507
        %v525 = vunpack.c.l.b16 %v508
        %v526 = vunpack.c.l.b16 %v509
        %v527 = vpack.c.b16 %v525, %v524
        %v528 = vpack.c.b16 %v526, %v526
        %vm529 = vcmask 64512
        %v531 = vsel %vm529, %v519, 0
        %v534 = vsel %vm529, %v520, 0
        %v537 = vsel %vm529, %v527, 0
        %v540 = vsel %vm529, %v528, 0
        %542 = vmatprep.subr.bf16.mxu0 0
        %543 = vmatpush1.bf16.xpose.msra.mxu0 %v537
        %544 = vmatprep.subr.bf16.mxu0 0
        %545 = vmatpush1.bf16.xpose.msra.mxu0 %v540
        %546 = vmatprep.subr.bf16.mxu0 0
        %547 = vmatpush1.bf16.xpose.msra.mxu0 0
        %548 = vmatprep.subr.bf16.mxu0 0
        %549 = vmatpush1.bf16.xpose.msra.mxu0 0
        %550 = vmatprep.subr.bf16.mxu0 0
        %551 = vmatpush1.bf16.xpose.msra.mxu0 0
        %552 = vmatprep.subr.bf16.mxu0 0
        %553 = vmatpush1.bf16.xpose.msra.mxu0 0
        %554 = vmatprep.subr.bf16.mxu0 0
        %555 = vmatpush1.bf16.xpose.msra.mxu0 0
        %556 = vmatprep.subr.bf16.mxu0 0
        %557 = vmatpush1.bf16.xpose.msra.mxu0 0
        %558 = vmatprep.subr.bf16.mxu0 0
        %559 = vmatpush1.bf16.xpose.msra.mxu0 0
        %560 = vmatprep.subr.bf16.mxu0 0
        %561 = vmatpush1.bf16.xpose.msra.mxu0 0
        %562 = vmatprep.subr.bf16.mxu0 0
        %563 = vmatpush1.bf16.xpose.msra.mxu0 0
        %564 = vmatprep.subr.bf16.mxu0 0
        %565 = vmatpush1.bf16.xpose.msra.mxu0 0
        %566 = vmatprep.subr.bf16.mxu0 0
        %567 = vmatpush1.bf16.xpose.msra.mxu0 0
        %568 = vmatprep.subr.bf16.mxu0 0
        %569 = vmatpush1.bf16.xpose.msra.mxu0 0
        %570 = vmatprep.subr.bf16.mxu0 0
        %571 = vmatpush1.bf16.xpose.msra.mxu0 0
        %572 = vmatprep.subr.bf16.mxu0 0
        %573 = vmatpush1.bf16.xpose.msra.mxu0 0
        %574 = vmatprep.mubr.bf16.mxu0 0
        %575 = vmatmul.mubr.bf16.gmra.mrb[0].mxu0 %v531
        %v576 = vpop.f32.mrb[0].mxu0
        %v577 = vadd.f32 0.0, %v576
        %v578 = vpop.f32.mrb[0].mxu0
        %v579 = vpop.f32.mrb[0].mxu0
        %v580 = vadd.f32 0.0, %v579
        %v581 = vpop.f32.mrb[0].mxu0
        %582 = vmatprep.mubr.bf16.mxu0 0
        %583 = vmatmul.mubr.bf16.gmra.mrb[0].mxu0 %v534
        %v584 = vpop.f32.mrb[0].mxu0
        %v585 = vadd.f32 0.0, %v584
        %v586 = vpop.f32.mrb[0].mxu0
        %v587 = vpop.f32.mrb[0].mxu0
        %v588 = vpop.f32.mrb[0].mxu0
        %589 = vdwg.mxu0
        %v590 = vmul.f32 %v577, 0.35355338
        %v591 = vmul.f32 %v580, 0.35355338
        %v592 = vmul.f32 %v585, 0.35355338
        %v593 = vlaneseq
        %v594 = vand.u32 %v593, 127
        %vm595 = vcmp.lt.s32.totalorder %v594, 18
        %v596 = vsel %vm595, %v590, -1e+30
        %v597 = vsel %vm595, %v591, -1e+30
        %v598 = vsel %vm595, %v592, -1e+30
        %vm599 = vcmask 195584
        %v600 = vsel %vm599, %v596, -inf
        %601 = vmax.xlane.f32.xlu0 %v600
        %v602 = vpop.xlane.xlu0 %601
        %v603 = vsel %vm599, %v597, -inf
        %604 = vmax.xlane.f32.xlu0 %v603
        %v605 = vpop.xlane.xlu0 %604
        %v606 = vsel %vm599, %v598, -inf
        %607 = vmax.xlane.f32.xlu0 %v606
        %v608 = vpop.xlane.xlu0 %607
        %v609 = vsub.f32 %v596, %v602
        %v610 = vsub.f32 %v597, %v605
        %v611 = vsub.f32 %v598, %v608
        %v612 = vmul.f32 %v609, 1.442695
        %v613 = vpow.pop %v612
        %v614 = vmul.f32 %v610, 1.442695
        %v615 = vpow.pop %v614
        %v616 = vmul.f32 %v611, 1.442695
        %v617 = vpow.pop %v616
        %v618 = vsel %vm599, %v613, 0.0
        %619 = vadd.xlane.f32.xlu0 %v618
        %v620 = vpop.xlane.xlu0 %619
        %v621 = vsel %vm599, %v615, 0.0
        %622 = vadd.xlane.f32.xlu0 %v621
        %v623 = vpop.xlane.xlu0 %622
        %v624 = vsel %vm599, %v617, 0.0
        %625 = vadd.xlane.f32.xlu0 %v624
        %v626 = vpop.xlane.xlu0 %625
        %v627 = vrcp.pop %v620
        %v628 = vrcp.pop %v623
        %v629 = vrcp.pop %v626
        %v630 = vmul.f32 %v613, %v627
        %v631 = vmul.f32 %v615, %v628
        %v632 = vmul.f32 %v617, %v629
        %v633 = vpack.c.bf16 %v631, %v630
        %v634 = vpack.c.bf16 %v632, %v632
        %v638 = vunpack.c.l.b16 %v510
        %v639 = vunpack.c.l.b16 %v511
        %v640 = vunpack.c.l.b16 %v512
        %v641 = vpack.c.b16 %v639, %v638
        %v642 = vpack.c.b16 %v640, %v640
        %v645 = vsel %vm599, %v633, 0
        %v648 = vsel %vm599, %v634, 0
        %vm650 = vcmask 1043456
        %v652 = vsel %vm650, %v642, 0
        %654 = vmatprep.subr.bf16.mxu0 0
        %655 = vmatpush1.bf16.msra.mxu0 %v641
        %656 = vmatprep.subr.bf16.mxu0 0
        %657 = vmatpush1.bf16.msra.mxu0 %v652
        %658 = vmatprep.subr.bf16.mxu0 0
        %659 = vmatpush1.bf16.msra.mxu0 0
        %660 = vmatprep.subr.bf16.mxu0 0
        %661 = vmatpush1.bf16.msra.mxu0 0
        %662 = vmatprep.subr.bf16.mxu0 0
        %663 = vmatpush1.bf16.msra.mxu0 0
        %664 = vmatprep.subr.bf16.mxu0 0
        %665 = vmatpush1.bf16.msra.mxu0 0
        %666 = vmatprep.subr.bf16.mxu0 0
        %667 = vmatpush1.bf16.msra.mxu0 0
        %668 = vmatprep.subr.bf16.mxu0 0
        %669 = vmatpush1.bf16.msra.mxu0 0
        %670 = vmatprep.subr.bf16.mxu0 0
        %671 = vmatpush1.bf16.msra.mxu0 0
        %672 = vmatprep.subr.bf16.mxu0 0
        %673 = vmatpush1.bf16.msra.mxu0 0
        %674 = vmatprep.subr.bf16.mxu0 0
        %675 = vmatpush1.bf16.msra.mxu0 0
        %676 = vmatprep.subr.bf16.mxu0 0
        %677 = vmatpush1.bf16.msra.mxu0 0
        %678 = vmatprep.subr.bf16.mxu0 0
        %679 = vmatpush1.bf16.msra.mxu0 0
        %680 = vmatprep.subr.bf16.mxu0 0
        %681 = vmatpush1.bf16.msra.mxu0 0
        %682 = vmatprep.subr.bf16.mxu0 0
        %683 = vmatpush1.bf16.msra.mxu0 0
        %684 = vmatprep.subr.bf16.mxu0 0
        %685 = vmatpush1.bf16.msra.mxu0 0
        %686 = vmatprep.mubr.bf16.mxu0 0
        %687 = vmatmul.mubr.bf16.gmra.mrb[0].mxu0 %v645
        %v688 = vpop.f32.mrb[0].mxu0
        %v689 = vadd.f32 0.0, %v688
        %v690 = vpop.f32.mrb[0].mxu0
        %v691 = vpop.f32.mrb[0].mxu0
        %v692 = vadd.f32 0.0, %v691
        %v693 = vpop.f32.mrb[0].mxu0
        %694 = vmatprep.mubr.bf16.mxu0 0
        %695 = vmatmul.mubr.bf16.gmra.mrb[0].mxu0 %v648
        %v696 = vpop.f32.mrb[0].mxu0
        %v697 = vadd.f32 0.0, %v696
        %v698 = vpop.f32.mrb[0].mxu0
        %v699 = vpop.f32.mrb[0].mxu0
        %v700 = vpop.f32.mrb[0].mxu0
        %701 = vdwg.mxu0
        %v702 = vld [vmem:[%s478] sm:$0xff]
        %v703 = vld [vmem:[%s478 + $0x8] sm:$0xff]
        %v704 = vld [vmem:[%s478 + $0x10] sm:$0xff]
        %v705 = vpack.c.bf16 %v692, %v689
        %v706 = vpack.c.bf16 %v697, %v697
        %v707 = vld [vmem:[%s417] sm:$0xf]
        %v709 = vsel %vm529, %v705, 0
        %v712 = vsel %vm529, %v706, 0
        %v715 = vsel %vm650, %v707, 0
        %717 = vmatprep.subr.bf16.mxu0 0
        %718 = vmatpush1.bf16.msra.mxu0 %v715
        %719 = vmatprep.subr.bf16.mxu0 0
        %720 = vmatpush1.bf16.msra.mxu0 0
        %721 = vmatprep.subr.bf16.mxu0 0
        %722 = vmatpush1.bf16.msra.mxu0 0
        %723 = vmatprep.subr.bf16.mxu0 0
        %724 = vmatpush1.bf16.msra.mxu0 0
        %725 = vmatprep.subr.bf16.mxu0 0
        %726 = vmatpush1.bf16.msra.mxu0 0
        %727 = vmatprep.subr.bf16.mxu0 0
        %728 = vmatpush1.bf16.msra.mxu0 0
        %729 = vmatprep.subr.bf16.mxu0 0
        %730 = vmatpush1.bf16.msra.mxu0 0
        %731 = vmatprep.subr.bf16.mxu0 0
        %732 = vmatpush1.bf16.msra.mxu0 0
        %733 = vmatprep.subr.bf16.mxu0 0
        %734 = vmatpush1.bf16.msra.mxu0 0
        %735 = vmatprep.subr.bf16.mxu0 0
        %736 = vmatpush1.bf16.msra.mxu0 0
        %737 = vmatprep.subr.bf16.mxu0 0
        %738 = vmatpush1.bf16.msra.mxu0 0
        %739 = vmatprep.subr.bf16.mxu0 0
        %740 = vmatpush1.bf16.msra.mxu0 0
        %741 = vmatprep.subr.bf16.mxu0 0
        %742 = vmatpush1.bf16.msra.mxu0 0
        %743 = vmatprep.subr.bf16.mxu0 0
        %744 = vmatpush1.bf16.msra.mxu0 0
        %745 = vmatprep.subr.bf16.mxu0 0
        %746 = vmatpush1.bf16.msra.mxu0 0
        %747 = vmatprep.subr.bf16.mxu0 0
        %748 = vmatpush1.bf16.msra.mxu0 0
        %749 = vmatprep.mubr.bf16.mxu0 0
        %750 = vmatmul.mubr.bf16.gmra.mrb[0].mxu0 %v709
        %v751 = vpop.f32.mrb[0].mxu0
        %v752 = vadd.f32 0.0, %v751
        %v753 = vpop.f32.mrb[0].mxu0
        %v754 = vpop.f32.mrb[0].mxu0
        %v755 = vadd.f32 0.0, %v754
        %v756 = vpop.f32.mrb[0].mxu0
        %757 = vmatprep.mubr.bf16.mxu0 0
        %758 = vmatmul.mubr.bf16.gmra.mrb[0].mxu0 %v712
        %v759 = vpop.f32.mrb[0].mxu0
        %v760 = vadd.f32 0.0, %v759
        %v761 = vpop.f32.mrb[0].mxu0
        %v762 = vpop.f32.mrb[0].mxu0
        %v763 = vpop.f32.mrb[0].mxu0
        %764 = vdwg.mxu0
        %v765 = vadd.f32 %v702, %v752
        %v766 = vadd.f32 %v703, %v755
        %v767 = vadd.f32 %v704, %v760
        %vm768 = vcmask 261120
        %769 = vst.msk [vmem:[%s478] sm:$0xff] %vm768, %v765
        %770 = vst.msk [vmem:[%s478 + $0x8] sm:$0xff] %vm768, %v766
        %771 = vst.msk [vmem:[%s478 + $0x10] sm:$0xff] %vm768, %v767
        %s772 = sand.u32 %s222, 1
        %s773 = scalar_lea.sflag [#allocation4], %s772
        %s774 = sand.u32 %s222, 1
        %s775 = smul.addr %s774, 24
        %s776 = scalar_lea.vmem [#allocation13], %s775
        // Predicated region
        $region73: #{ast_forward.11} parent=43 // pred_check
          %p777 = pneg %p232
        $region74: #{ast_forward.11} parent=43 // pred_check_branch
          %779 = sbr.rel (%p777) target = $region76
        $region75: #{ast_forward.11} parent=43 // pred_region
          %s780 = smul.u32 3, %s38
          %s782 = ssub.s32 384, 384
          %783 = vsyncadd %s773, %s782
          %s784 = smul.addr %s37, 3
          %s785 = sadd.s32 %s780, %s784
          %s786 = smul.addr %s785, 128
          %s787 = scalar_lea.hbm %s6, %s786
          %s788 = sshll.u32 %s776, 4
          %s789 = int_to_ptr.vmem [resolvable:$true] %s788
          %794 = dma.vmem_to_hbm [thread:$0]  %s789, 384, %s787, %s773, 128, 128, 8
        $region76: #{ast_forward.11} parent=43 // pred_fallthru
          _
      $region44: #{ast_forward.11} parent=5 // pred_fallthru
        _
      %p795 = scmp.le.s32.totalorder 2, %s27
      // Predicated region
      $region77: #{ast_forward.11} parent=5 // pred_check
        %p796 = pneg %p795
      $region78: #{ast_forward.11} parent=5 // pred_check_branch
        %798 = sbr.rel (%p796) target = $region80
      $region79: #{ast_forward.11} parent=5 // pred_region
        %s799 = ssub.s32 %s27, 2
        // Predicated region
        $region81: #{ast_forward.11} parent=79 // pred_check
          %p800 = pneg %p238
        $region82: #{ast_forward.11} parent=79 // pred_check_branch
          %802 = sbr.rel (%p800) target = $region84
        $region83: #{ast_forward.11} parent=79 // pred_region
          %s803 = sand.u32 %s223, 1
          %s804 = scalar_lea.sflag [#allocation4], %s803
          %s805 = sand.u32 %s223, 1
          %s806 = smul.addr %s805, 24
          %s807 = scalar_lea.vmem [#allocation13], %s806
          %808 = dma.done %s804, 384
        $region84: #{ast_forward.11} parent=79 // pred_fallthru
          _
      $region80: #{ast_forward.11} parent=5 // pred_fallthru
        _
    $region6: #{ast_forward.11} parent=1 // loop_footer
      %s31 = sadd.s32 1, %s27
    $region7: #{ast_forward.11} parent=1 // loop_footer_branch
      %26 = sbr.rel target = $region3
    $region8: #{ast_forward.11} parent=1 // loop_exit
      _
    %809 = vsyncpa [#allocation3], 1
    %s810 = scalar_lea.sflag [#allocation3], 1
    %811 = vsyncpa %s810, 1
    %812 = vsyncpa [#allocation6], 1
    %s813 = scalar_lea.sflag [#allocation6], 1
    %814 = vsyncpa %s813, 1
    %815 = vsyncpa [#allocation9], 1
    %s816 = scalar_lea.sflag [#allocation9], 1
    %817 = vsyncpa %s816, 1
    %818 = vsyncpa [#allocation12], 1
    %s819 = scalar_lea.sflag [#allocation12], 1
    %820 = vsyncpa %s819, 1
    %821 = vsyncpa [#allocation4], 1
    %s822 = scalar_lea.sflag [#allocation4], 1
    %823 = vsyncpa %s822, 1

// kernel: ast_forward.12
$region0: #{ast_forward.12}
  #allocation0 [shape = 'u32[]', space=smem, size = 0x4, offset = 0x4, fixed_abs, tag = 'smem constant byte address 0x4 - core index']
  #allocation1 [shape = 'u32[144,128]{1,0:T(1,128)}', space=vmem, size = 0x12000, scoped, tag = 'internal scratch']
  %s0 = inlined_call_operand.hbm [shape: f32[48,32], index: 0, kind: input, shape index: {}]
  %s1 = inlined_call_operand.hbm [shape: f32[1,32], index: 1, kind: input, shape index: {}]
  %s2 = inlined_call_operand.hbm [shape: f32[1,32], index: 2, kind: input, shape index: {}]
  %s3 = inlined_call_operand.hbm [shape: bf16[32,64], index: 3, kind: input, shape index: {}]
  %s4 = inlined_call_operand.hbm [shape: f32[1,64], index: 4, kind: input, shape index: {}]
  %s5 = inlined_call_operand.hbm [shape: bf16[48,64], index: 5, kind: output, shape index: {}]
  %s6 = sld [smem:[#allocation0]]
  $region50: #{ast_forward.12} parent=0
    _
  %s8 = ssub.s32 1, %s6
  %s9 = scalar_select 0, %s8, %s6
  $region1: #{ast_forward.12} parent=0
    #allocation2 [shape = 'u8[24576]{0}', space=vmem, size = 0x6000, scoped, tag = 'input window, operand 0, single buffered']
    #allocation3 [shape = 's32[1]{0}', space=sflag, size = 0x4, scoped, tag = 'scoped memory for ast_forward.12']
    #allocation4 [shape = 's32[1]{0}', space=sflag, size = 0x4, scoped, tag = 'scoped memory for ast_forward.12']
    #allocation5 [shape = 'u8[512]{0}', space=vmem, size = 0x400, scoped, tag = 'input window, operand 1, single buffered']
    #allocation6 [shape = 's32[1]{0}', space=sflag, size = 0x4, scoped, tag = 'scoped memory for ast_forward.12']
    #allocation7 [shape = 'u8[512]{0}', space=vmem, size = 0x400, scoped, tag = 'input window, operand 2, single buffered']
    #allocation8 [shape = 'u8[8192]{0}', space=vmem, size = 0x2000, scoped, tag = 'input window, operand 3, single buffered']
    #allocation9 [shape = 's32[1]{0}', space=sflag, size = 0x4, scoped, tag = 'scoped memory for ast_forward.12']
    #allocation10 [shape = 'u8[512]{0}', space=vmem, size = 0x400, scoped, tag = 'input window, operand 4, single buffered']
    #allocation11 [shape = 'u8[12288]{0}', space=vmem, size = 0x3000, scoped, tag = 'output window, operand 0, single buffered']
    %10 = vsyncpa [#allocation3], 0
    %11 = vsyncpa [#allocation6], 0
    %12 = vsyncpa [#allocation9], 0
    %13 = vsyncpa [#allocation4], 0
    // Predicated region
    $region2: #{ast_forward.12} parent=1 // pred_check
      _
    $region3: #{ast_forward.12} parent=1 // pred_check_branch
      %15 = sbr.rel (0) target = $region5
    $region4: #{ast_forward.12} parent=1 // pred_region
      %s17 = ssub.s32 768, 768
      %18 = vsyncadd [#allocation3], %s17
      %s19 = sshll.u32 [#allocation2], 4
      %s20 = int_to_ptr.vmem [resolvable:$true] %s19
      %25 = dma.hbm_to_vmem [thread:$0]  %s0, 768, %s20, [#allocation3], 128, 128, 8
    $region5: #{ast_forward.12} parent=1 // pred_fallthru
      _
    // Predicated region
    $region6: #{ast_forward.12} parent=1 // pred_check
      _
    $region7: #{ast_forward.12} parent=1 // pred_check_branch
      %27 = sbr.rel (0) target = $region9
    $region8: #{ast_forward.12} parent=1 // pred_region
      %s29 = ssub.s32 16, 16
      %30 = vsyncadd [#allocation6], %s29
      %s32 = sshll.u32 [#allocation5], 4
      %s33 = int_to_ptr.vmem [resolvable:$true] %s32
      %35 = dma.hbm_to_vmem [thread:$0]  %s1, 16, %s33, [#allocation6]
    $region9: #{ast_forward.12} parent=1 // pred_fallthru
      _
    // Predicated region
    $region10: #{ast_forward.12} parent=1 // pred_check
      _
    $region11: #{ast_forward.12} parent=1 // pred_check_branch
      %37 = sbr.rel (0) target = $region13
    $region12: #{ast_forward.12} parent=1 // pred_region
      %s39 = ssub.s32 16, 16
      %40 = vsyncadd [#allocation6], %s39
      %s42 = sshll.u32 [#allocation7], 4
      %s43 = int_to_ptr.vmem [resolvable:$true] %s42
      %45 = dma.hbm_to_vmem [thread:$0]  %s2, 16, %s43, [#allocation6]
    $region13: #{ast_forward.12} parent=1 // pred_fallthru
      _
    // Predicated region
    $region14: #{ast_forward.12} parent=1 // pred_check
      _
    $region15: #{ast_forward.12} parent=1 // pred_check_branch
      %47 = sbr.rel (0) target = $region17
    $region16: #{ast_forward.12} parent=1 // pred_region
      %s49 = ssub.s32 256, 256
      %50 = vsyncadd [#allocation9], %s49
      %s51 = sshll.u32 [#allocation8], 4
      %s52 = int_to_ptr.vmem [resolvable:$true] %s51
      %57 = dma.hbm_to_vmem [thread:$0]  %s3, 256, %s52, [#allocation9], 64, 64, 4
    $region17: #{ast_forward.12} parent=1 // pred_fallthru
      _
    // Predicated region
    $region18: #{ast_forward.12} parent=1 // pred_check
      _
    $region19: #{ast_forward.12} parent=1 // pred_check_branch
      %59 = sbr.rel (0) target = $region21
    $region20: #{ast_forward.12} parent=1 // pred_region
      %s61 = ssub.s32 16, 16
      %62 = vsyncadd [#allocation9], %s61
      %s64 = sshll.u32 [#allocation10], 4
      %s65 = int_to_ptr.vmem [resolvable:$true] %s64
      %67 = dma.hbm_to_vmem [thread:$0]  %s4, 16, %s65, [#allocation9]
    $region21: #{ast_forward.12} parent=1 // pred_fallthru
      _
    // Predicated region
    $region22: #{ast_forward.12} parent=1 // pred_check
      _
    $region23: #{ast_forward.12} parent=1 // pred_check_branch
      %69 = sbr.rel (0) target = $region25
    $region24: #{ast_forward.12} parent=1 // pred_region
      %70 = dma.done [#allocation3], 768
    $region25: #{ast_forward.12} parent=1 // pred_fallthru
      _
    // Predicated region
    $region26: #{ast_forward.12} parent=1 // pred_check
      _
    $region27: #{ast_forward.12} parent=1 // pred_check_branch
      %72 = sbr.rel (0) target = $region29
    $region28: #{ast_forward.12} parent=1 // pred_region
      %73 = dma.done [#allocation6], 16
    $region29: #{ast_forward.12} parent=1 // pred_fallthru
      _
    // Predicated region
    $region30: #{ast_forward.12} parent=1 // pred_check
      _
    $region31: #{ast_forward.12} parent=1 // pred_check_branch
      %75 = sbr.rel (0) target = $region33
    $region32: #{ast_forward.12} parent=1 // pred_region
      %76 = dma.done [#allocation6], 16
    $region33: #{ast_forward.12} parent=1 // pred_fallthru
      _
    // Predicated region
    $region34: #{ast_forward.12} parent=1 // pred_check
      _
    $region35: #{ast_forward.12} parent=1 // pred_check_branch
      %78 = sbr.rel (0) target = $region37
    $region36: #{ast_forward.12} parent=1 // pred_region
      %79 = dma.done [#allocation9], 256
    $region37: #{ast_forward.12} parent=1 // pred_fallthru
      _
    // Predicated region
    $region38: #{ast_forward.12} parent=1 // pred_check
      _
    $region39: #{ast_forward.12} parent=1 // pred_check_branch
      %81 = sbr.rel (0) target = $region41
    $region40: #{ast_forward.12} parent=1 // pred_region
      %82 = dma.done [#allocation9], 16
    $region41: #{ast_forward.12} parent=1 // pred_fallthru
      _
    %v84 = vld [vmem:[#allocation2] sm:$0xff]
    %v85 = vld [vmem:[#allocation2 + $0x8] sm:$0xff]
    %v86 = vld [vmem:[#allocation2 + $0x10] sm:$0xff]
    %v87 = vld [vmem:[#allocation2 + $0x18] sm:$0xff]
    %v88 = vld [vmem:[#allocation2 + $0x20] sm:$0xff]
    %v89 = vld [vmem:[#allocation2 + $0x28] sm:$0xff]
    %v90 = vld [vmem:[#allocation5] sm:$0x1]
    %v91 = vld [vmem:[#allocation7] sm:$0x1]
    %vm92 = vcmask 261120
    %v93 = vsel %vm92, %v84, 0.0
    %94 = vadd.xlane.f32.xlu0 %v93
    %v95 = vpop.xlane.xlu0 %94
    %v96 = vsel %vm92, %v85, 0.0
    %97 = vadd.xlane.f32.xlu0 %v96
    %v98 = vpop.xlane.xlu0 %97
    %v99 = vsel %vm92, %v86, 0.0
    %100 = vadd.xlane.f32.xlu0 %v99
    %v101 = vpop.xlane.xlu0 %100
    %v102 = vsel %vm92, %v87, 0.0
    %103 = vadd.xlane.f32.xlu0 %v102
    %v104 = vpop.xlane.xlu0 %103
    %v105 = vsel %vm92, %v88, 0.0
    %106 = vadd.xlane.f32.xlu0 %v105
    %v107 = vpop.xlane.xlu0 %106
    %v108 = vsel %vm92, %v89, 0.0
    %109 = vadd.xlane.f32.xlu0 %v108
    %v110 = vpop.xlane.xlu0 %109
    %v111 = vrcp.pop 32.0
    %v112 = vmul.f32 %v95, %v111
    %v113 = vmul.f32 %v98, %v111
    %v114 = vmul.f32 %v101, %v111
    %v115 = vmul.f32 %v104, %v111
    %v116 = vmul.f32 %v107, %v111
    %v117 = vmul.f32 %v110, %v111
    %v118 = vsub.f32 %v84, %v112
    %v119 = vsub.f32 %v85, %v113
    %v120 = vsub.f32 %v86, %v114
    %v121 = vsub.f32 %v87, %v115
    %v122 = vsub.f32 %v88, %v116
    %v123 = vsub.f32 %v89, %v117
    %v124 = vmul.f32 %v118, %v118
    %v125 = vmul.f32 %v119, %v119
    %v126 = vmul.f32 %v120, %v120
    %v127 = vmul.f32 %v121, %v121
    %v128 = vmul.f32 %v122, %v122
    %v129 = vmul.f32 %v123, %v123
    %v130 = vsel %vm92, %v124, 0.0
    %131 = vadd.xlane.f32.xlu0 %v130
    %v132 = vpop.xlane.xlu0 %131
    %v133 = vsel %vm92, %v125, 0.0
    %134 = vadd.xlane.f32.xlu0 %v133
    %v135 = vpop.xlane.xlu0 %134
    %v136 = vsel %vm92, %v126, 0.0
    %137 = vadd.xlane.f32.xlu0 %v136
    %v138 = vpop.xlane.xlu0 %137
    %v139 = vsel %vm92, %v127, 0.0
    %140 = vadd.xlane.f32.xlu0 %v139
    %v141 = vpop.xlane.xlu0 %140
    %v142 = vsel %vm92, %v128, 0.0
    %143 = vadd.xlane.f32.xlu0 %v142
    %v144 = vpop.xlane.xlu0 %143
    %v145 = vsel %vm92, %v129, 0.0
    %146 = vadd.xlane.f32.xlu0 %v145
    %v147 = vpop.xlane.xlu0 %146
    %v148 = vmul.f32 %v132, %v111
    %v149 = vmul.f32 %v135, %v111
    %v150 = vmul.f32 %v138, %v111
    %v151 = vmul.f32 %v141, %v111
    %v152 = vmul.f32 %v144, %v111
    %v153 = vmul.f32 %v147, %v111
    %v154 = vadd.f32 %v148, 1e-12
    %v155 = vadd.f32 %v149, 1e-12
    %v156 = vadd.f32 %v150, 1e-12
    %v157 = vadd.f32 %v151, 1e-12
    %v158 = vadd.f32 %v152, 1e-12
    %v159 = vadd.f32 %v153, 1e-12
    %v160 = vrsqrt.pop %v154
    %v161 = vrsqrt.pop %v155
    %v162 = vrsqrt.pop %v156
    %v163 = vrsqrt.pop %v157
    %v164 = vrsqrt.pop %v158
    %v165 = vrsqrt.pop %v159
    %v166 = vmul.f32 %v118, %v160
    %v167 = vmul.f32 %v119, %v161
    %v168 = vmul.f32 %v120, %v162
    %v169 = vmul.f32 %v121, %v163
    %v170 = vmul.f32 %v122, %v164
    %v171 = vmul.f32 %v123, %v165
    %v173 = vlaneseq
    %v174 = vshrl.u32 %v173, 7
    %v175 = vsub.s32 0, %v174
    %v176 = vrot.slane %v90, %v175
    %v178 = vmul.f32 %v166, %v176
    %v179 = vmul.f32 %v167, %v176
    %v180 = vmul.f32 %v168, %v176
    %v181 = vmul.f32 %v169, %v176
    %v182 = vmul.f32 %v170, %v176
    %v183 = vmul.f32 %v171, %v176
    %v185 = vlaneseq
    %v186 = vshrl.u32 %v185, 7
    %v187 = vsub.s32 0, %v186
    %v188 = vrot.slane %v91, %v187
    %v190 = vadd.f32 %v178, %v188
    %v191 = vadd.f32 %v179, %v188
    %v192 = vadd.f32 %v180, %v188
    %v193 = vadd.f32 %v181, %v188
    %v194 = vadd.f32 %v182, %v188
    %v195 = vadd.f32 %v183, %v188
    %v196 = vpack.c.bf16 %v191, %v190
    %v197 = vpack.c.bf16 %v193, %v192
    %v198 = vpack.c.bf16 %v195, %v194
    %v199 = vld [vmem:[#allocation8] sm:$0xf]
    %v200 = vld [vmem:[#allocation8 + $0x4] sm:$0xf]
    %v201 = vld [vmem:[#allocation8 + $0x8] sm:$0xf]
    %v202 = vld [vmem:[#allocation8 + $0xc] sm:$0xf]
    %v203 = vld [vmem:[#allocation10] sm:$0x1]
    %v205 = vlaneseq
    %v206 = vshrl.u32 %v205, 7
    %v207 = vsub.s32 0, %v206
    %v208 = vrot.slane %v203, %v207
    %v214 = vunpack.c.l.b16 %v199
    %v215 = vunpack.c.l.b16 %v200
    %v216 = vunpack.c.l.b16 %v201
    %v217 = vunpack.c.l.b16 %v202
    %v218 = vpack.c.b16 %v215, %v214
    %v219 = vpack.c.b16 %v217, %v216
    %v223 = vsel %vm92, %v196, 0
    %v226 = vsel %vm92, %v197, 0
    %v229 = vsel %vm92, %v198, 0
    %231 = vmatprep.subr.bf16.mxu0 0
    %232 = vmatpush1.bf16.msra.mxu0 %v218
    %233 = vmatprep.subr.bf16.mxu0 0
    %234 = vmatpush1.bf16.msra.mxu0 %v219
    %235 = vmatprep.subr.bf16.mxu0 0
    %236 = vmatpush1.bf16.msra.mxu0 0
    %237 = vmatprep.subr.bf16.mxu0 0
    %238 = vmatpush1.bf16.msra.mxu0 0
    %239 = vmatprep.subr.bf16.mxu0 0
    %240 = vmatpush1.bf16.msra.mxu0 0
    %241 = vmatprep.subr.bf16.mxu0 0
    %242 = vmatpush1.bf16.msra.mxu0 0
    %243 = vmatprep.subr.bf16.mxu0 0
    %244 = vmatpush1.bf16.msra.mxu0 0
    %245 = vmatprep.subr.bf16.mxu0 0
    %246 = vmatpush1.bf16.msra.mxu0 0
    %247 = vmatprep.subr.bf16.mxu0 0
    %248 = vmatpush1.bf16.msra.mxu0 0
    %249 = vmatprep.subr.bf16.mxu0 0
    %250 = vmatpush1.bf16.msra.mxu0 0
    %251 = vmatprep.subr.bf16.mxu0 0
    %252 = vmatpush1.bf16.msra.mxu0 0
    %253 = vmatprep.subr.bf16.mxu0 0
    %254 = vmatpush1.bf16.msra.mxu0 0
    %255 = vmatprep.subr.bf16.mxu0 0
    %256 = vmatpush1.bf16.msra.mxu0 0
    %257 = vmatprep.subr.bf16.mxu0 0
    %258 = vmatpush1.bf16.msra.mxu0 0
    %259 = vmatprep.subr.bf16.mxu0 0
    %260 = vmatpush1.bf16.msra.mxu0 0
    %261 = vmatprep.subr.bf16.mxu0 0
    %262 = vmatpush1.bf16.msra.mxu0 0
    %263 = vmatprep.mubr.bf16.mxu0 0
    %264 = vmatmul.mubr.bf16.gmra.mrb[0].mxu0 %v223
    %v265 = vpop.f32.mrb[0].mxu0
    %v266 = vadd.f32 %v208, %v265
    %v267 = vpop.f32.mrb[0].mxu0
    %v268 = vpop.f32.mrb[0].mxu0
    %v269 = vadd.f32 %v208, %v268
    %v270 = vpop.f32.mrb[0].mxu0
    %271 = vmatprep.mubr.bf16.mxu0 0
    %272 = vmatmul.mubr.bf16.gmra.mrb[0].mxu0 %v226
    %v273 = vpop.f32.mrb[0].mxu0
    %v274 = vadd.f32 %v208, %v273
    %v275 = vpop.f32.mrb[0].mxu0
    %v276 = vpop.f32.mrb[0].mxu0
    %v277 = vadd.f32 %v208, %v276
    %v278 = vpop.f32.mrb[0].mxu0
    %279 = vmatprep.mubr.bf16.mxu0 0
    %280 = vmatmul.mubr.bf16.gmra.mrb[0].mxu0 %v229
    %v281 = vpop.f32.mrb[0].mxu0
    %v282 = vadd.f32 %v208, %v281
    %v283 = vpop.f32.mrb[0].mxu0
    %v284 = vpop.f32.mrb[0].mxu0
    %v285 = vadd.f32 %v208, %v284
    %v286 = vpop.f32.mrb[0].mxu0
    %287 = vdwg.mxu0
    %v288 = vmul.f32 %v266, 0.70710677
    %v289 = vmul.f32 %v269, 0.70710677
    %v290 = vmul.f32 %v274, 0.70710677
    %v291 = vmul.f32 %v277, 0.70710677
    %v292 = vmul.f32 %v282, 0.70710677
    %v293 = vmul.f32 %v285, 0.70710677
    %v294 = vand.u32 2147483647, %v288
    %v295 = vand.u32 2147483647, %v289
    %v296 = vand.u32 2147483647, %v290
    %v297 = vand.u32 2147483647, %v291
    %v298 = vand.u32 2147483647, %v292
    %v299 = vand.u32 2147483647, %v293
    %v300 = vmul.f32 %v294, 0.3275911
    %v301 = vmul.f32 %v295, 0.3275911
    %v302 = vmul.f32 %v296, 0.3275911
    %v303 = vmul.f32 %v297, 0.3275911
    %v304 = vmul.f32 %v298, 0.3275911
    %v305 = vmul.f32 %v299, 0.3275911
    %v306 = vadd.f32 %v300, 1.0
    %v307 = vadd.f32 %v301, 1.0
    %v308 = vadd.f32 %v302, 1.0
    %v309 = vadd.f32 %v303, 1.0
    %v310 = vadd.f32 %v304, 1.0
    %v311 = vadd.f32 %v305, 1.0
    %v312 = vrcp.pop %v306
    %v313 = vmul.f32 1.0, %v312
    %v314 = vrcp.pop %v307
    %v315 = vmul.f32 1.0, %v314
    %v316 = vrcp.pop %v308
    %v317 = vmul.f32 1.0, %v316
    %v318 = vrcp.pop %v309
    %v319 = vmul.f32 1.0, %v318
    %v320 = vrcp.pop %v310
    %v321 = vmul.f32 1.0, %v320
    %v322 = vrcp.pop %v311
    %v323 = vmul.f32 1.0, %v322
    %v324 = vmul.f32 %v313, 1.0614054
    %v325 = vmul.f32 %v315, 1.0614054
    %v326 = vmul.f32 %v317, 1.0614054
    %v327 = vmul.f32 %v319, 1.0614054
    %v328 = vmul.f32 %v321, 1.0614054
    %v329 = vmul.f32 %v323, 1.0614054
    %v330 = vadd.f32 %v324, -1.4531521
    %v331 = vadd.f32 %v325, -1.4531521
    %v332 = vadd.f32 %v326, -1.4531521
    %v333 = vadd.f32 %v327, -1.4531521
    %v334 = vadd.f32 %v328, -1.4531521
    %v335 = vadd.f32 %v329, -1.4531521
    %v336 = vmul.f32 %v313, %v330
    %v337 = vmul.f32 %v315, %v331
    %v338 = vmul.f32 %v317, %v332
    %v339 = vmul.f32 %v319, %v333
    %v340 = vmul.f32 %v321, %v334
    %v341 = vmul.f32 %v323, %v335
    %v342 = vadd.f32 %v336, 1.4214138
    %v343 = vadd.f32 %v337, 1.4214138
    %v344 = vadd.f32 %v338, 1.4214138
    %v345 = vadd.f32 %v339, 1.4214138
    %v346 = vadd.f32 %v340, 1.4214138
    %v347 = vadd.f32 %v341, 1.4214138
    %v348 = vmul.f32 %v313, %v342
    %v349 = vmul.f32 %v315, %v343
    %v350 = vmul.f32 %v317, %v344
    %v351 = vmul.f32 %v319, %v345
    %v352 = vmul.f32 %v321, %v346
    %v353 = vmul.f32 %v323, %v347
    %v354 = vadd.f32 %v348, -0.28449672
    %v355 = vadd.f32 %v349, -0.28449672
    %v356 = vadd.f32 %v350, -0.28449672
    %v357 = vadd.f32 %v351, -0.28449672
    %v358 = vadd.f32 %v352, -0.28449672
    %v359 = vadd.f32 %v353, -0.28449672
    %v360 = vmul.f32 %v313, %v354
    %v361 = vmul.f32 %v315, %v355
    %v362 = vmul.f32 %v317, %v356
    %v363 = vmul.f32 %v319, %v357
    %v364 = vmul.f32 %v321, %v358
    %v365 = vmul.f32 %v323, %v359
    %v366 = vadd.f32 %v360, 0.2548296
    %v367 = vadd.f32 %v361, 0.2548296
    %v368 = vadd.f32 %v362, 0.2548296
    %v369 = vadd.f32 %v363, 0.2548296
    %v370 = vadd.f32 %v364, 0.2548296
    %v371 = vadd.f32 %v365, 0.2548296
    %v372 = vmul.f32 %v313, %v366
    %v373 = vmul.f32 %v315, %v367
    %v374 = vmul.f32 %v317, %v368
    %v375 = vmul.f32 %v319, %v369
    %v376 = vmul.f32 %v321, %v370
    %v377 = vmul.f32 %v323, %v371
    %v378 = vsub.f32 0.0, %v294
    %v379 = vsub.f32 0.0, %v295
    %v380 = vsub.f32 0.0, %v296
    %v381 = vsub.f32 0.0, %v297
    %v382 = vsub.f32 0.0, %v298
    %v383 = vsub.f32 0.0, %v299
    %v384 = vmul.f32 %v378, %v294
    %v385 = vmul.f32 %v379, %v295
    %v386 = vmul.f32 %v380, %v296
    %v387 = vmul.f32 %v381, %v297
    %v388 = vmul.f32 %v382, %v298
    %v389 = vmul.f32 %v383, %v299
    %v390 = vmul.f32 %v384, 1.442695
    %v391 = vpow.pop %v390
    %v392 = vmul.f32 %v385, 1.442695
    %v393 = vpow.pop %v392
    %v394 = vmul.f32 %v386, 1.442695
    %v395 = vpow.pop %v394
    %v396 = vmul.f32 %v387, 1.442695
    %v397 = vpow.pop %v396
    %v398 = vmul.f32 %v388, 1.442695
    %v399 = vpow.pop %v398
    %v400 = vmul.f32 %v389, 1.442695
    %v401 = vpow.pop %v400
    %v402 = vmul.f32 %v372, %v391
    %v403 = vmul.f32 %v373, %v393
    %v404 = vmul.f32 %v374, %v395
    %v405 = vmul.f32 %v375, %v397
    %v406 = vmul.f32 %v376, %v399
    %v407 = vmul.f32 %v377, %v401
    %v408 = vsub.f32 1.0, %v402
    %v409 = vsub.f32 1.0, %v403
    %v410 = vsub.f32 1.0, %v404
    %v411 = vsub.f32 1.0, %v405
    %v412 = vsub.f32 1.0, %v406
    %v413 = vsub.f32 1.0, %v407
    %vm414 = vcmp.ge.f32.partialorder %v288, 0.0
    %vm415 = vcmp.ge.f32.partialorder %v289, 0.0
    %vm416 = vcmp.ge.f32.partialorder %v290, 0.0
    %vm417 = vcmp.ge.f32.partialorder %v291, 0.0
    %vm418 = vcmp.ge.f32.partialorder %v292, 0.0
    %vm419 = vcmp.ge.f32.partialorder %v293, 0.0
    %v420 = vsub.f32 0.0, %v408
    %v421 = vsub.f32 0.0, %v409
    %v422 = vsub.f32 0.0, %v410
    %v423 = vsub.f32 0.0, %v411
    %v424 = vsub.f32 0.0, %v412
    %v425 = vsub.f32 0.0, %v413
    %v426 = vsel %vm414, %v408, %v420
    %v427 = vsel %vm415, %v409, %v421
    %v428 = vsel %vm416, %v410, %v422
    %v429 = vsel %vm417, %v411, %v423
    %v430 = vsel %vm418, %v412, %v424
    %v431 = vsel %vm419, %v413, %v425
    %v432 = vmul.f32 %v266, 0.5
    %v433 = vmul.f32 %v269, 0.5
    %v434 = vmul.f32 %v274, 0.5
    %v435 = vmul.f32 %v277, 0.5
    %v436 = vmul.f32 %v282, 0.5
    %v437 = vmul.f32 %v285, 0.5
    %v438 = vadd.f32 %v426, 1.0
    %v439 = vadd.f32 %v427, 1.0
    %v440 = vadd.f32 %v428, 1.0
    %v441 = vadd.f32 %v429, 1.0
    %v442 = vadd.f32 %v430, 1.0
    %v443 = vadd.f32 %v431, 1.0
    %v444 = vmul.f32 %v432, %v438
    %v445 = vmul.f32 %v433, %v439
    %v446 = vmul.f32 %v434, %v440
    %v447 = vmul.f32 %v435, %v441
    %v448 = vmul.f32 %v436, %v442
    %v449 = vmul.f32 %v437, %v443
    %v450 = vpack.c.bf16 %v445, %v444
    %v451 = vpack.c.bf16 %v447, %v446
    %v452 = vpack.c.bf16 %v449, %v448
    %v456 = vunpack.c.l.b16 %v450
    %v457 = vunpack.c.h.b16 %v450
    %v458 = vunpack.c.l.b16 %v451
    %v459 = vunpack.c.h.b16 %v451
    %v460 = vunpack.c.l.b16 %v452
    %v461 = vunpack.c.h.b16 %v452
    %v462 = vpack.c.b16 %v456, %v456
    %v463 = vpack.c.b16 %v457, %v457
    %v464 = vpack.c.b16 %v458, %v458
    %v465 = vpack.c.b16 %v459, %v459
    %v466 = vpack.c.b16 %v460, %v460
    %v467 = vpack.c.b16 %v461, %v461
    %vm474 = vcmask 519168
    %475 = vst.msk [vmem:[#allocation11] sm:$0xf] %vm474, %v462
    %476 = vst.msk [vmem:[#allocation11 + $0x4] sm:$0xf] %vm474, %v463
    %477 = vst.msk [vmem:[#allocation11 + $0x8] sm:$0xf] %vm474, %v464
    %478 = vst.msk [vmem:[#allocation11 + $0xc] sm:$0xf] %vm474, %v465
    %479 = vst.msk [vmem:[#allocation11 + $0x10] sm:$0xf] %vm474, %v466
    %480 = vst.msk [vmem:[#allocation11 + $0x14] sm:$0xf] %vm474, %v467
    // Predicated region
    $region42: #{ast_forward.12} parent=1 // pred_check
      _
    $region43: #{ast_forward.12} parent=1 // pred_check_branch
      %482 = sbr.rel (0) target = $region45
    $region44: #{ast_forward.12} parent=1 // pred_region
      %s484 = ssub.s32 384, 384
      %485 = vsyncadd [#allocation4], %s484
      %s486 = sshll.u32 [#allocation11], 4
      %s487 = int_to_ptr.vmem [resolvable:$true] %s486
      %492 = dma.vmem_to_hbm [thread:$0]  %s487, 384, %s5, [#allocation4], 64, 64, 4
    $region45: #{ast_forward.12} parent=1 // pred_fallthru
      _
    // Predicated region
    $region46: #{ast_forward.12} parent=1 // pred_check
      _
    $region47: #{ast_forward.12} parent=1 // pred_check_branch
      %494 = sbr.rel (0) target = $region49
    $region48: #{ast_forward.12} parent=1 // pred_region
      %495 = dma.done [#allocation4], 384
    $region49: #{ast_forward.12} parent=1 // pred_fallthru
      _
    %496 = vsyncpa [#allocation3], 1
    %497 = vsyncpa [#allocation6], 1
    %498 = vsyncpa [#allocation9], 1
    %499 = vsyncpa [#allocation4], 1

</llo_original>
